<compile_context>
chip_gen: v6e
topology: v6e:2x2x1
jax: 0.10.0
libtpu: 0.0.40
codegen_flags: <defaults>
</compile_context>

<pallas_src>
import functools

import jax
import jax.numpy as jnp
from jax.experimental import pallas as pl
from jax.experimental.pallas import tpu as pltpu

_LANE = 128
_SUBLANE = 8


def _round_up(x, m):
    return ((x + m - 1) // m) * m


def _persistence_kernel(gdps_ref, obs_ref, forecast_ref, out_ref, *, inv_t):
    """One (batch, station-tile) grid step.

    gdps_ref / obs_ref   : (1, TILE_S, T)  native [B, S, T] blocks
                           (stations on sublanes, small time axis on lanes)
    forecast_ref/out_ref : (1, 1, TILE_S)  stations lane-dense
    """
    # Subtraction in the input dtype (matches torch), accumulation in f32 below.
    diff = gdps_ref[...] - obs_ref[...]
    # torch.nan_to_num(x, 0.0): NaN -> 0.0, +inf -> finite max, -inf -> finite min.
    # jnp.nan_to_num's defaults match exactly; do not replace with an isnan-only
    # select (inf handling would silently diverge).
    diff = jnp.nan_to_num(diff, nan=0.0)
    # Per-station lane reduce over T (single XLU reduce per row-group), f32 acc.
    bias = jnp.sum(diff.astype(jnp.float32), axis=-1) * inv_t       # (1, TILE_S)
    fc = forecast_ref[...].astype(jnp.float32)                      # (1, 1, TILE_S)
    out_ref[...] = (fc - bias[:, None, :]).astype(out_ref.dtype)


def _pick_tile_s(S, T, itemsize, vmem_block_budget_bytes):
    """Largest station tile whose double-buffered VMEM blocks fit the budget.

    VMEM cost per station row (sublane):
      2 big inputs x 2 buffers x (T padded to a full 128-lane vreg row)
      + forecast/out blocks x 2 buffers x ~8 sublane-padded elements.
    """
    lane_bytes = _round_up(T, _LANE) * itemsize
    per_row = 2 * 2 * lane_bytes + 2 * 2 * _SUBLANE * itemsize
    cap = max(_SUBLANE, vmem_block_budget_bytes // per_row)
    if S <= cap:
        return S  # full-extent block dim is always legal, regardless of S % 8
    # Interior tiles: keep TILE_S a multiple of 128 so the forecast/output
    # (1, 1, TILE_S) blocks satisfy the lane rule and the store stays unmasked.
    return max(_LANE, (cap // _LANE) * _LANE)


def persistence_forward(batch, *, tile_s=None,
                        vmem_block_budget_bytes=24 * 1024 * 1024):
    gdps = batch["ts_gdps_2t"]      # [B, S, T]  (native layout, no transpose)
    obs = batch["ts_obs_2t"]        # [B, S, T]
    forecast = batch["forecast"]    # [B, S]

    B, S, T = gdps.shape
    assert obs.shape == (B, S, T)
    assert forecast.shape == (B, S)

    itemsize = jnp.dtype(gdps.dtype).itemsize

    if tile_s is None:
        tile_s = _pick_tile_s(S, T, itemsize, vmem_block_budget_bytes)
    else:
        tile_s = min(tile_s, S)
        if tile_s < S:
            # interior tiles must satisfy the (8, 128) block rules
            assert tile_s % _LANE == 0, "tile_s override must be a multiple of 128"

    s_tiles = pl.cdiv(S, tile_s)     # partial edge block instead of padding S
    grid = (B, s_tiles)

    # Free (contiguous) reshape so forecast/output last-two block dims are
    # (1, TILE_S): sublane dim 1 == full extent, lane dim TILE_S lane-dense.
    forecast_3d = forecast.reshape(B, 1, S)
    out_dtype = forecast.dtype
    fc_itemsize = jnp.dtype(out_dtype).itemsize

    cost = pl.CostEstimate(
        flops=B * S * (2 * T + 2),
        transcendentals=0,
        bytes_accessed=2 * B * S * T * itemsize + 2 * B * S * fc_itemsize,
    )

    kernel = functools.partial(_persistence_kernel, inv_t=1.0 / float(T))

    out_3d = pl.pallas_call(
        kernel,
        out_shape=jax.ShapeDtypeStruct((B, 1, S), out_dtype),
        grid=grid,
        in_specs=[
            pl.BlockSpec((1, tile_s, T), lambda b, s: (b, s, 0)),
            pl.BlockSpec((1, tile_s, T), lambda b, s: (b, s, 0)),
            pl.BlockSpec((1, 1, tile_s), lambda b, s: (b, 0, s)),
        ],
        out_specs=pl.BlockSpec((1, 1, tile_s), lambda b, s: (b, 0, s)),
        compiler_params=pltpu.CompilerParams(
            dimension_semantics=("parallel", "parallel"),
            vmem_limit_bytes=40 * 1024 * 1024,
        ),
        cost_estimate=cost,
    )(gdps, obs, forecast_3d)

    return out_3d.reshape(B, S)


def persistence_reference(batch):
    bias = batch["ts_gdps_2t"] - batch["ts_obs_2t"]
    bias = jnp.nan_to_num(bias, nan=0.0)
    bias = jnp.mean(bias, axis=2)
    return batch["forecast"] - bias


if __name__ == "__main__":
    key = jax.random.PRNGKey(0)
    B, S, T = 2, 256, 8  # batch, stations, past days

    k1, k2, k3 = jax.random.split(key, 3)
    ts_gdps = jax.random.normal(k1, (B, S, T), dtype=jnp.float32) + 280.0
    ts_obs = jax.random.normal(k2, (B, S, T), dtype=jnp.float32) + 279.5
    forecast = jax.random.normal(k3, (B, S), dtype=jnp.float32) + 281.0

    # sprinkle NaNs in the observations (missing data), as the model expects
    ts_obs = ts_obs.at[0, 3, 2].set(jnp.nan)
    ts_obs = ts_obs.at[1, 137, 5].set(jnp.nan)
    ts_obs = ts_obs.at[1, 255, 0].set(jnp.nan)

    batch = {"ts_gdps_2t": ts_gdps, "ts_obs_2t": ts_obs, "forecast": forecast}

    # 1) default tiling (single full-extent station tile per batch element)
    out = jax.block_until_ready(persistence_forward(batch))
    ref = persistence_reference(batch)
    assert out.shape == (B, S)
    assert jnp.allclose(out, ref, atol=1e-5, rtol=1e-5), "mismatch vs reference"

    # 2) forced small tile with a non-multiple S -> exercises the partial edge
    #    block path that replaces the old jnp.pad (no padding of the inputs).
    S2 = 200
    batch2 = {
        "ts_gdps_2t": ts_gdps[:, :S2],
        "ts_obs_2t": ts_obs[:, :S2],
        "forecast": forecast[:, :S2],
    }
    out2 = jax.block_until_ready(persistence_forward(batch2, tile_s=128))
    ref2 = persistence_reference(batch2)
    assert out2.shape == (B, S2)
    assert jnp.allclose(out2, ref2, atol=1e-5, rtol=1e-5), "mismatch vs reference (partial tile)"

    print("KERNEL_OK")
</pallas_src>

<mosaic_0001>
module attributes {stable_mosaic.version = 11 : i64} {
  func.func @_persistence_kernel(%arg0: i32, %arg1: i32, %arg2: memref<1x256x8xf32, #tpu.memory_space<vmem>>, %arg3: memref<1x256x8xf32, #tpu.memory_space<vmem>>, %arg4: memref<1x1x256xf32, #tpu.memory_space<vmem>>, %arg5: memref<1x1x256xf32, #tpu.memory_space<vmem>>) attributes {dimension_semantics = [#tpu.dimension_semantics<parallel>, #tpu.dimension_semantics<parallel>], iteration_bounds = array<i64: 2, 1>, scalar_prefetch = 0 : i64, scratch_operands = 0 : i64, tpu.core_type = #tpu.core_type<tc>, window_params = [{transform_indices = @transform_0, window_bounds = array<i64: 1, 256, 8>}, {transform_indices = @transform_1, window_bounds = array<i64: 1, 256, 8>}, {transform_indices = @transform_2, window_bounds = array<i64: 1, 1, 256>}, {transform_indices = @transform_3, window_bounds = array<i64: 1, 1, 256>}]} {
    %c0 = arith.constant 0 : index
    %c0_0 = arith.constant 0 : index
    %c0_1 = arith.constant 0 : index
    %0 = vector.load %arg2[%c0, %c0_0, %c0_1] : memref<1x256x8xf32, #tpu.memory_space<vmem>>, vector<1x256x8xf32>
    %c0_2 = arith.constant 0 : index
    %c0_3 = arith.constant 0 : index
    %c0_4 = arith.constant 0 : index
    %1 = vector.load %arg3[%c0_2, %c0_3, %c0_4] : memref<1x256x8xf32, #tpu.memory_space<vmem>>, vector<1x256x8xf32>
    %2 = arith.subf %0, %1 : vector<1x256x8xf32>
    %cst = arith.constant 0.000000e+00 : f32
    %3 = arith.cmpf one, %2, %2 : vector<1x256x8xf32>
    %4 = vector.broadcast %cst : f32 to vector<1x256x8xf32>
    %5 = arith.select %3, %4, %2 : vector<1x256x8xi1>, vector<1x256x8xf32>
    %cst_5 = arith.constant 0x7F800000 : f32
    %6 = vector.broadcast %cst_5 : f32 to vector<1x256x8xf32>
    %7 = arith.cmpf oeq, %5, %6 : vector<1x256x8xf32>
    %cst_6 = arith.constant 3.40282347E+38 : f32
    %8 = vector.broadcast %cst_6 : f32 to vector<1x256x8xf32>
    %9 = arith.select %7, %8, %5 : vector<1x256x8xi1>, vector<1x256x8xf32>
    %cst_7 = arith.constant 0xFF800000 : f32
    %10 = vector.broadcast %cst_7 : f32 to vector<1x256x8xf32>
    %11 = arith.cmpf oeq, %9, %10 : vector<1x256x8xf32>
    %cst_8 = arith.constant -3.40282347E+38 : f32
    %12 = vector.broadcast %cst_8 : f32 to vector<1x256x8xf32>
    %13 = arith.select %11, %12, %9 : vector<1x256x8xi1>, vector<1x256x8xf32>
    %cst_9 = arith.constant dense<0.000000e+00> : vector<1x256xf32>
    %14 = vector.multi_reduction <add>, %13, %cst_9 [2] : vector<1x256x8xf32> to vector<1x256xf32>
    %cst_10 = arith.constant 1.250000e-01 : f32
    %15 = vector.broadcast %cst_10 : f32 to vector<1x256xf32>
    %16 = arith.mulf %14, %15 : vector<1x256xf32>
    %c0_11 = arith.constant 0 : index
    %c0_12 = arith.constant 0 : index
    %c0_13 = arith.constant 0 : index
    %17 = vector.load %arg4[%c0_11, %c0_12, %c0_13] : memref<1x1x256xf32, #tpu.memory_space<vmem>>, vector<1x1x256xf32>
    %18 = vector.shape_cast %16 : vector<1x256xf32> to vector<1x1x256xf32>
    %19 = arith.subf %17, %18 : vector<1x1x256xf32>
    %c0_14 = arith.constant 0 : index
    %c0_15 = arith.constant 0 : index
    %c0_16 = arith.constant 0 : index
    %20 = vector.load %arg5[%c0_14, %c0_15, %c0_16] : memref<1x1x256xf32, #tpu.memory_space<vmem>>, vector<1x1x256xf32>
    tpu.vector_store %arg5[%c0_14, %c0_15, %c0_16], %19 {strides = array<i32>} : memref<1x1x256xf32, #tpu.memory_space<vmem>>, vector<1x1x256xf32>,
    return
  }
  func.func @transform_0(%arg0: i32, %arg1: i32) -> (i32, i32, i32) {
    %c0_i32 = arith.constant 0 : i32
    %c0_i32_0 = arith.constant 0 : i32
    return %arg0, %arg1, %c0_i32 : i32, i32, i32
  }
  func.func @transform_1(%arg0: i32, %arg1: i32) -> (i32, i32, i32) {
    %c0_i32 = arith.constant 0 : i32
    %c0_i32_0 = arith.constant 0 : i32
    return %arg0, %arg1, %c0_i32 : i32, i32, i32
  }
  func.func @transform_2(%arg0: i32, %arg1: i32) -> (i32, i32, i32) {
    %c0_i32 = arith.constant 0 : i32
    %c0_i32_0 = arith.constant 0 : i32
    return %arg0, %c0_i32, %arg1 : i32, i32, i32
  }
  func.func @transform_3(%arg0: i32, %arg1: i32) -> (i32, i32, i32) {
    %c0_i32 = arith.constant 0 : i32
    %c0_i32_0 = arith.constant 0 : i32
    return %arg0, %c0_i32, %arg1 : i32, i32, i32
  }
}

</mosaic_0001>

<llo_original>
// kernel: tpu_custom_call.1
$region0: #{tpu_custom_call.1}
  #allocation0 [shape = 'u32[]', space=smem, size = 0x4, offset = 0x4, fixed_abs, tag = 'smem constant byte address 0x4 - core index']
  #allocation1 [shape = 'u32[144,128]{1,0:T(1,128)}', space=vmem, size = 0x12000, scoped, tag = 'internal scratch']
  %s0 = inlined_call_operand.vmem [shape: f32[2,256,8], index: 0, kind: input, shape index: {}]
  %s1 = inlined_call_operand.vmem [shape: f32[2,256,8], index: 1, kind: input, shape index: {}]
  %s2 = inlined_call_operand.vmem [shape: f32[2,1,256], index: 2, kind: input, shape index: {}]
  %s3 = inlined_call_operand.hbm [shape: f32[2,1,256], index: 3, kind: output, shape index: {}]
  %s4 = sld [smem:[#allocation0]]
  $region45: #{tpu_custom_call.1} parent=0
    _
  %s6 = ssub.s32 1, %s4
  %s7 = scalar_select 0, %s6, %s4
  $region1: #{tpu_custom_call.1} parent=0
    #allocation2 [shape = 'u8[2048]{0}', space=vmem, size = 0x800, scoped, tag = 'output window, operand 0']
    #allocation3 [shape = 's32[2]{0}', space=sflag, size = 0x8, scoped, tag = 'scoped memory for tpu_custom_call.1']
    %8 = vsyncpa [#allocation3], 0
    %s9 = scalar_lea.sflag [#allocation3], 1
    %10 = vsyncpa %s9, 0
    loop: start=0, step=1, limit=4
    $region2: #{tpu_custom_call.1} parent=1 // loop_pre_header
      _
    $region3: #{tpu_custom_call.1} parent=1 // loop_header
      %s12 = sphi 0, %s16
      %p13 = scmp.ge.s32.totalorder %s12, 4
      %s19 = sphi 0, %s31
      %s20 = sphi 0, %s27
      %s21 = sphi 0, %s19
      %s22 = sphi 0, %s20
      %s23 = sphi 0, %s21
      %s24 = sphi 0, %s22
      %s36 = sphi 0, %s38
      %s39 = sphi 0, %s36
      %s40 = sphi 0, %s39
      %s56 = sphi 0, %s40
      %s64 = sphi 0, %s66
      %s67 = sphi 0, %s64
      %s68 = sphi 0, %s67
      %s84 = sphi 0, %s68
      %s92 = sphi 0, %s94
      %s95 = sphi 0, %s92
      %s96 = sphi 0, %s95
      %s112 = sphi 0, %s96
      %s120 = sphi 0, %s122
      %s123 = sphi 0, %s120
      %s124 = sphi 0, %s123
      %s140 = sphi 0, %s124
    $region4: #{tpu_custom_call.1} parent=1 // loop_header_branch
      %15 = sbr.rel (%p13) target = $region8
    $region5: #{tpu_custom_call.1} parent=1 // loop_body
      %s17 = ssub.s32 %s12, 1
      %s18 = ssub.s32 %s12, 2
      %s25 = sadd.s32 1, %s20
      %p26 = scmp.ge.s32.totalorder %s25, 1
      %s27 = scalar_select %p26, 0, %s25
      %s28 = sadd.s32 1, %s19
      %s29 = scalar_select %p26, %s28, %s19
      %p30 = scmp.ge.s32.totalorder %s29, 2
      %s31 = scalar_select %p30, 0, %s29
      %s32 = ssub.s32 %s19, %s31
      %s33 = ssub.s32 %s20, %s27
      %s34 = sor.u32 %s32, %s33
      %p35 = scmp.eq.s32.totalorder %s34, 0
      %s37 = sadd.s32 %s36, 1
      %s38 = scalar_select %p35, %s36, %s37
      %p41 = pneg %p35
      %p42 = scmp.eq.s32.totalorder %s12, 1
      %p43 = por %p41, %p42
      %p44 = scmp.ne.s32.totalorder %s36, %s39
      %p45 = scmp.eq.s32.totalorder %s12, 0
      %p46 = por %p44, %p45
      %p47 = scmp.ne.s32.totalorder %s36, %s39
      %p48 = scmp.eq.s32.totalorder %s17, 1
      %p49 = por %p47, %p48
      %p50 = scmp.ne.s32.totalorder %s39, %s40
      %p51 = scmp.eq.s32.totalorder %s17, 0
      %p52 = por %p50, %p51
      %p53 = scmp.ne.s32.totalorder %s39, %s40
      %p54 = scmp.eq.s32.totalorder %s18, 1
      %p55 = por %p53, %p54
      %p57 = scmp.ne.s32.totalorder %s40, %s56
      %p58 = scmp.eq.s32.totalorder %s18, 0
      %p59 = por %p57, %p58
      %s60 = ssub.s32 %s19, %s31
      %s61 = ssub.s32 %s20, %s27
      %s62 = sor.u32 %s60, %s61
      %p63 = scmp.eq.s32.totalorder %s62, 0
      %s65 = sadd.s32 %s64, 1
      %s66 = scalar_select %p63, %s64, %s65
      %p69 = pneg %p63
      %p70 = scmp.eq.s32.totalorder %s12, 1
      %p71 = por %p69, %p70
      %p72 = scmp.ne.s32.totalorder %s64, %s67
      %p73 = scmp.eq.s32.totalorder %s12, 0
      %p74 = por %p72, %p73
      %p75 = scmp.ne.s32.totalorder %s64, %s67
      %p76 = scmp.eq.s32.totalorder %s17, 1
      %p77 = por %p75, %p76
      %p78 = scmp.ne.s32.totalorder %s67, %s68
      %p79 = scmp.eq.s32.totalorder %s17, 0
      %p80 = por %p78, %p79
      %p81 = scmp.ne.s32.totalorder %s67, %s68
      %p82 = scmp.eq.s32.totalorder %s18, 1
      %p83 = por %p81, %p82
      %p85 = scmp.ne.s32.totalorder %s68, %s84
      %p86 = scmp.eq.s32.totalorder %s18, 0
      %p87 = por %p85, %p86
      %s88 = ssub.s32 %s19, %s31
      %s89 = ssub.s32 %s20, %s27
      %s90 = sor.u32 %s88, %s89
      %p91 = scmp.eq.s32.totalorder %s90, 0
      %s93 = sadd.s32 %s92, 1
      %s94 = scalar_select %p91, %s92, %s93
      %p97 = pneg %p91
      %p98 = scmp.eq.s32.totalorder %s12, 1
      %p99 = por %p97, %p98
      %p100 = scmp.ne.s32.totalorder %s92, %s95
      %p101 = scmp.eq.s32.totalorder %s12, 0
      %p102 = por %p100, %p101
      %p103 = scmp.ne.s32.totalorder %s92, %s95
      %p104 = scmp.eq.s32.totalorder %s17, 1
      %p105 = por %p103, %p104
      %p106 = scmp.ne.s32.totalorder %s95, %s96
      %p107 = scmp.eq.s32.totalorder %s17, 0
      %p108 = por %p106, %p107
      %p109 = scmp.ne.s32.totalorder %s95, %s96
      %p110 = scmp.eq.s32.totalorder %s18, 1
      %p111 = por %p109, %p110
      %p113 = scmp.ne.s32.totalorder %s96, %s112
      %p114 = scmp.eq.s32.totalorder %s18, 0
      %p115 = por %p113, %p114
      %s116 = ssub.s32 %s19, %s31
      %s117 = ssub.s32 %s20, %s27
      %s118 = sor.u32 %s116, %s117
      %p119 = scmp.eq.s32.totalorder %s118, 0
      %s121 = sadd.s32 %s120, 1
      %s122 = scalar_select %p119, %s120, %s121
      %p125 = pneg %p119
      %p126 = scmp.eq.s32.totalorder %s12, 1
      %p127 = por %p125, %p126
      %p128 = scmp.ne.s32.totalorder %s120, %s123
      %p129 = scmp.eq.s32.totalorder %s12, 0
      %p130 = por %p128, %p129
      %p131 = scmp.ne.s32.totalorder %s120, %s123
      %p132 = scmp.eq.s32.totalorder %s17, 1
      %p133 = por %p131, %p132
      %p134 = scmp.ne.s32.totalorder %s123, %s124
      %p135 = scmp.eq.s32.totalorder %s17, 0
      %p136 = por %p134, %p135
      %p137 = scmp.ne.s32.totalorder %s123, %s124
      %p138 = scmp.eq.s32.totalorder %s18, 1
      %p139 = por %p137, %p138
      %p141 = scmp.ne.s32.totalorder %s124, %s140
      %p142 = scmp.eq.s32.totalorder %s18, 0
      %p143 = por %p141, %p142
      %p144 = scmp.le.s32.totalorder 1, %s12
      %p145 = scmp.lt.s32.totalorder %s12, 3
      %p146 = pnand %p144, %p145
      %p147 = pneg %p146
      // Predicated region
      $region9: #{tpu_custom_call.1} parent=5 // pred_check
        _
      $region10: #{tpu_custom_call.1} parent=5 // pred_check_branch
        %149 = sbr.rel (%p146) target = $region12
      $region11: #{tpu_custom_call.1} parent=5 // pred_region
        %s150 = ssub.s32 %s12, 1
      $region12: #{tpu_custom_call.1} parent=5 // pred_fallthru
        _
      %p151 = scmp.lt.s32.totalorder %s12, 2
      // Predicated region
      $region13: #{tpu_custom_call.1} parent=5 // pred_check
        %p152 = pneg %p151
      $region14: #{tpu_custom_call.1} parent=5 // pred_check_branch
        %154 = sbr.rel (%p152) target = $region16
      $region15: #{tpu_custom_call.1} parent=5 // pred_region
        // Predicated region
        $region17: #{tpu_custom_call.1} parent=15 // pred_check
          %p155 = pneg %p46
        $region18: #{tpu_custom_call.1} parent=15 // pred_check_branch
          %157 = sbr.rel (%p155) target = $region20
        $region19: #{tpu_custom_call.1} parent=15 // pred_region
          %s158 = smul.u32 32, %s20
          %p159 = scmp.lt.s32.totalorder %s19, 1
          %s160 = scalar_select %p159, %s19, 1
          %p161 = scmp.lt.s32.totalorder %s158, 31
          %s162 = scalar_select %p161, %s158, 31
          %s163 = smul.addr %s160, 32
          %s164 = sadd.s32 %s162, %s163
          %s165 = smul.addr %s164, 8
          %s166 = scalar_lea.vmem %s0, %s165
          %s167 = smul.u32 32, %s20
        $region20: #{tpu_custom_call.1} parent=15 // pred_fallthru
          _
        // Predicated region
        $region21: #{tpu_custom_call.1} parent=15 // pred_check
          %p168 = pneg %p74
        $region22: #{tpu_custom_call.1} parent=15 // pred_check_branch
          %170 = sbr.rel (%p168) target = $region24
        $region23: #{tpu_custom_call.1} parent=15 // pred_region
          %s171 = smul.u32 32, %s20
          %p172 = scmp.lt.s32.totalorder %s19, 1
          %s173 = scalar_select %p172, %s19, 1
          %p174 = scmp.lt.s32.totalorder %s171, 31
          %s175 = scalar_select %p174, %s171, 31
          %s176 = smul.addr %s173, 32
          %s177 = sadd.s32 %s175, %s176
          %s178 = smul.addr %s177, 8
          %s179 = scalar_lea.vmem %s1, %s178
          %s180 = smul.u32 32, %s20
        $region24: #{tpu_custom_call.1} parent=15 // pred_fallthru
          _
        // Predicated region
        $region25: #{tpu_custom_call.1} parent=15 // pred_check
          %p181 = pneg %p102
        $region26: #{tpu_custom_call.1} parent=15 // pred_check_branch
          %183 = sbr.rel (%p181) target = $region28
        $region27: #{tpu_custom_call.1} parent=15 // pred_region
          %s184 = smul.u32 2, %s20
          %p185 = scmp.lt.s32.totalorder %s19, 1
          %s186 = scalar_select %p185, %s19, 1
          %p187 = scmp.lt.s32.totalorder %s184, 1
          %s188 = scalar_select %p187, %s184, 1
          %s189 = smul.addr %s186, 2
          %s190 = sadd.s32 %s188, %s189
          %s191 = scalar_lea.vmem %s2, %s190
          %s192 = smul.u32 2, %s20
        $region28: #{tpu_custom_call.1} parent=15 // pred_fallthru
          _
      $region16: #{tpu_custom_call.1} parent=5 // pred_fallthru
        _
      %p193 = scmp.le.s32.totalorder 1, %s12
      %p194 = scmp.lt.s32.totalorder %s12, 3
      %p195 = pnand %p193, %p194
      %p196 = pneg %p195
      // Predicated region
      $region29: #{tpu_custom_call.1} parent=5 // pred_check
        _
      $region30: #{tpu_custom_call.1} parent=5 // pred_check_branch
        %198 = sbr.rel (%p195) target = $region32
      $region31: #{tpu_custom_call.1} parent=5 // pred_region
        %s199 = ssub.s32 %s12, 1
        %s200 = smul.u32 32, %s22
        %p201 = scmp.lt.s32.totalorder %s21, 1
        %s202 = scalar_select %p201, %s21, 1
        %p203 = scmp.lt.s32.totalorder %s200, 31
        %s204 = scalar_select %p203, %s200, 31
        %s205 = smul.addr %s202, 32
        %s206 = sadd.s32 %s204, %s205
        %s207 = smul.addr %s206, 8
        %s208 = scalar_lea.vmem %s0, %s207
        %p209 = pneg %p52
        %p210 = pneg %p49
        %s211 = smul.u32 32, %s22
        %p212 = scmp.lt.s32.totalorder %s21, 1
        %s213 = scalar_select %p212, %s21, 1
        %p214 = scmp.lt.s32.totalorder %s211, 31
        %s215 = scalar_select %p214, %s211, 31
        %s216 = smul.addr %s213, 32
        %s217 = sadd.s32 %s215, %s216
        %s218 = smul.addr %s217, 8
        %s219 = scalar_lea.vmem %s1, %s218
        %p220 = pneg %p80
        %p221 = pneg %p77
        %s222 = smul.u32 2, %s22
        %p223 = scmp.lt.s32.totalorder %s21, 1
        %s224 = scalar_select %p223, %s21, 1
        %p225 = scmp.lt.s32.totalorder %s222, 1
        %s226 = scalar_select %p225, %s222, 1
        %s227 = smul.addr %s224, 2
        %s228 = sadd.s32 %s226, %s227
        %s229 = scalar_lea.vmem %s2, %s228
        %p230 = pneg %p108
        %p231 = pneg %p105
        %p232 = pneg %p136
        %p233 = pneg %p133
        %s234 = sand.u32 %s123, 1
        %s235 = scalar_lea.sflag [#allocation3], %s234
        %s236 = sand.u32 %s123, 1
        %s237 = smul.addr %s236, 2
        %s238 = scalar_lea.vmem [#allocation2], %s237
        %s239 = smul.u32 32, %s22
        %p240 = scmp.lt.s32.totalorder %s21, 1
        %s241 = scalar_select %p240, %s21, 1
        %p242 = scmp.lt.s32.totalorder %s239, 31
        %s243 = scalar_select %p242, %s239, 31
        %s244 = smul.addr %s241, 32
        %s245 = sadd.s32 %s243, %s244
        %s246 = smul.addr %s245, 8
        %s247 = scalar_lea.vmem %s0, %s246
        %s248 = smul.u32 32, %s22
        %s249 = smul.u32 32, %s22
        %p250 = scmp.lt.s32.totalorder %s21, 1
        %s251 = scalar_select %p250, %s21, 1
        %p252 = scmp.lt.s32.totalorder %s249, 31
        %s253 = scalar_select %p252, %s249, 31
        %s254 = smul.addr %s251, 32
        %s255 = sadd.s32 %s253, %s254
        %s256 = smul.addr %s255, 8
        %s257 = scalar_lea.vmem %s1, %s256
        %s258 = smul.u32 32, %s22
        %s259 = smul.u32 2, %s22
        %p260 = scmp.lt.s32.totalorder %s21, 1
        %s261 = scalar_select %p260, %s21, 1
        %p262 = scmp.lt.s32.totalorder %s259, 1
        %s263 = scalar_select %p262, %s259, 1
        %s264 = smul.addr %s261, 2
        %s265 = sadd.s32 %s263, %s264
        %s266 = scalar_lea.vmem %s2, %s265
        %s267 = smul.u32 2, %s22
        %s268 = smul.u32 2, %s22
        %v269 = vld [vmem:[%s247] sm:$0xff]
        %v270 = vld [vmem:[%s247 + $0x8] sm:$0xff]
        %v271 = vld [vmem:[%s247 + $0x10] sm:$0xff]
        %v272 = vld [vmem:[%s247 + $0x18] sm:$0xff]
        %v273 = vld [vmem:[%s247 + $0x20] sm:$0xff]
        %v274 = vld [vmem:[%s247 + $0x28] sm:$0xff]
        %v275 = vld [vmem:[%s247 + $0x30] sm:$0xff]
        %v276 = vld [vmem:[%s247 + $0x38] sm:$0xff]
        %v277 = vld [vmem:[%s247 + $0x40] sm:$0xff]
        %v278 = vld [vmem:[%s247 + $0x48] sm:$0xff]
        %v279 = vld [vmem:[%s247 + $0x50] sm:$0xff]
        %v280 = vld [vmem:[%s247 + $0x58] sm:$0xff]
        %v281 = vld [vmem:[%s247 + $0x60] sm:$0xff]
        %v282 = vld [vmem:[%s247 + $0x68] sm:$0xff]
        %v283 = vld [vmem:[%s247 + $0x70] sm:$0xff]
        %v284 = vld [vmem:[%s247 + $0x78] sm:$0xff]
        %v285 = vld [vmem:[%s247 + $0x80] sm:$0xff]
        %v286 = vld [vmem:[%s247 + $0x88] sm:$0xff]
        %v287 = vld [vmem:[%s247 + $0x90] sm:$0xff]
        %v288 = vld [vmem:[%s247 + $0x98] sm:$0xff]
        %v289 = vld [vmem:[%s247 + $0xa0] sm:$0xff]
        %v290 = vld [vmem:[%s247 + $0xa8] sm:$0xff]
        %v291 = vld [vmem:[%s247 + $0xb0] sm:$0xff]
        %v292 = vld [vmem:[%s247 + $0xb8] sm:$0xff]
        %v293 = vld [vmem:[%s247 + $0xc0] sm:$0xff]
        %v294 = vld [vmem:[%s247 + $0xc8] sm:$0xff]
        %v295 = vld [vmem:[%s247 + $0xd0] sm:$0xff]
        %v296 = vld [vmem:[%s247 + $0xd8] sm:$0xff]
        %v297 = vld [vmem:[%s247 + $0xe0] sm:$0xff]
        %v298 = vld [vmem:[%s247 + $0xe8] sm:$0xff]
        %v299 = vld [vmem:[%s247 + $0xf0] sm:$0xff]
        %v300 = vld [vmem:[%s247 + $0xf8] sm:$0xff]
        %v301 = vld [vmem:[%s257] sm:$0xff]
        %v302 = vld [vmem:[%s257 + $0x8] sm:$0xff]
        %v303 = vld [vmem:[%s257 + $0x10] sm:$0xff]
        %v304 = vld [vmem:[%s257 + $0x18] sm:$0xff]
        %v305 = vld [vmem:[%s257 + $0x20] sm:$0xff]
        %v306 = vld [vmem:[%s257 + $0x28] sm:$0xff]
        %v307 = vld [vmem:[%s257 + $0x30] sm:$0xff]
        %v308 = vld [vmem:[%s257 + $0x38] sm:$0xff]
        %v309 = vld [vmem:[%s257 + $0x40] sm:$0xff]
        %v310 = vld [vmem:[%s257 + $0x48] sm:$0xff]
        %v311 = vld [vmem:[%s257 + $0x50] sm:$0xff]
        %v312 = vld [vmem:[%s257 + $0x58] sm:$0xff]
        %v313 = vld [vmem:[%s257 + $0x60] sm:$0xff]
        %v314 = vld [vmem:[%s257 + $0x68] sm:$0xff]
        %v315 = vld [vmem:[%s257 + $0x70] sm:$0xff]
        %v316 = vld [vmem:[%s257 + $0x78] sm:$0xff]
        %v317 = vld [vmem:[%s257 + $0x80] sm:$0xff]
        %v318 = vld [vmem:[%s257 + $0x88] sm:$0xff]
        %v319 = vld [vmem:[%s257 + $0x90] sm:$0xff]
        %v320 = vld [vmem:[%s257 + $0x98] sm:$0xff]
        %v321 = vld [vmem:[%s257 + $0xa0] sm:$0xff]
        %v322 = vld [vmem:[%s257 + $0xa8] sm:$0xff]
        %v323 = vld [vmem:[%s257 + $0xb0] sm:$0xff]
        %v324 = vld [vmem:[%s257 + $0xb8] sm:$0xff]
        %v325 = vld [vmem:[%s257 + $0xc0] sm:$0xff]
        %v326 = vld [vmem:[%s257 + $0xc8] sm:$0xff]
        %v327 = vld [vmem:[%s257 + $0xd0] sm:$0xff]
        %v328 = vld [vmem:[%s257 + $0xd8] sm:$0xff]
        %v329 = vld [vmem:[%s257 + $0xe0] sm:$0xff]
        %v330 = vld [vmem:[%s257 + $0xe8] sm:$0xff]
        %v331 = vld [vmem:[%s257 + $0xf0] sm:$0xff]
        %v332 = vld [vmem:[%s257 + $0xf8] sm:$0xff]
        %v333 = vsub.f32 %v269, %v301
        %v334 = vsub.f32 %v270, %v302
        %v335 = vsub.f32 %v271, %v303
        %v336 = vsub.f32 %v272, %v304
        %v337 = vsub.f32 %v273, %v305
        %v338 = vsub.f32 %v274, %v306
        %v339 = vsub.f32 %v275, %v307
        %v340 = vsub.f32 %v276, %v308
        %v341 = vsub.f32 %v277, %v309
        %v342 = vsub.f32 %v278, %v310
        %v343 = vsub.f32 %v279, %v311
        %v344 = vsub.f32 %v280, %v312
        %v345 = vsub.f32 %v281, %v313
        %v346 = vsub.f32 %v282, %v314
        %v347 = vsub.f32 %v283, %v315
        %v348 = vsub.f32 %v284, %v316
        %v349 = vsub.f32 %v285, %v317
        %v350 = vsub.f32 %v286, %v318
        %v351 = vsub.f32 %v287, %v319
        %v352 = vsub.f32 %v288, %v320
        %v353 = vsub.f32 %v289, %v321
        %v354 = vsub.f32 %v290, %v322
        %v355 = vsub.f32 %v291, %v323
        %v356 = vsub.f32 %v292, %v324
        %v357 = vsub.f32 %v293, %v325
        %v358 = vsub.f32 %v294, %v326
        %v359 = vsub.f32 %v295, %v327
        %v360 = vsub.f32 %v296, %v328
        %v361 = vsub.f32 %v297, %v329
        %v362 = vsub.f32 %v298, %v330
        %v363 = vsub.f32 %v299, %v331
        %v364 = vsub.f32 %v300, %v332
        %vm365 = vcmp.ne.f32.partialorder %v333, %v333
        %vm366 = vcmp.ne.f32.partialorder %v334, %v334
        %vm367 = vcmp.ne.f32.partialorder %v335, %v335
        %vm368 = vcmp.ne.f32.partialorder %v336, %v336
        %vm369 = vcmp.ne.f32.partialorder %v337, %v337
        %vm370 = vcmp.ne.f32.partialorder %v338, %v338
        %vm371 = vcmp.ne.f32.partialorder %v339, %v339
        %vm372 = vcmp.ne.f32.partialorder %v340, %v340
        %vm373 = vcmp.ne.f32.partialorder %v341, %v341
        %vm374 = vcmp.ne.f32.partialorder %v342, %v342
        %vm375 = vcmp.ne.f32.partialorder %v343, %v343
        %vm376 = vcmp.ne.f32.partialorder %v344, %v344
        %vm377 = vcmp.ne.f32.partialorder %v345, %v345
        %vm378 = vcmp.ne.f32.partialorder %v346, %v346
        %vm379 = vcmp.ne.f32.partialorder %v347, %v347
        %vm380 = vcmp.ne.f32.partialorder %v348, %v348
        %vm381 = vcmp.ne.f32.partialorder %v349, %v349
        %vm382 = vcmp.ne.f32.partialorder %v350, %v350
        %vm383 = vcmp.ne.f32.partialorder %v351, %v351
        %vm384 = vcmp.ne.f32.partialorder %v352, %v352
        %vm385 = vcmp.ne.f32.partialorder %v353, %v353
        %vm386 = vcmp.ne.f32.partialorder %v354, %v354
        %vm387 = vcmp.ne.f32.partialorder %v355, %v355
        %vm388 = vcmp.ne.f32.partialorder %v356, %v356
        %vm389 = vcmp.ne.f32.partialorder %v357, %v357
        %vm390 = vcmp.ne.f32.partialorder %v358, %v358
        %vm391 = vcmp.ne.f32.partialorder %v359, %v359
        %vm392 = vcmp.ne.f32.partialorder %v360, %v360
        %vm393 = vcmp.ne.f32.partialorder %v361, %v361
        %vm394 = vcmp.ne.f32.partialorder %v362, %v362
        %vm395 = vcmp.ne.f32.partialorder %v363, %v363
        %vm396 = vcmp.ne.f32.partialorder %v364, %v364
        %v397 = vsel %vm365, 0.0, %v333
        %v398 = vsel %vm366, 0.0, %v334
        %v399 = vsel %vm367, 0.0, %v335
        %v400 = vsel %vm368, 0.0, %v336
        %v401 = vsel %vm369, 0.0, %v337
        %v402 = vsel %vm370, 0.0, %v338
        %v403 = vsel %vm371, 0.0, %v339
        %v404 = vsel %vm372, 0.0, %v340
        %v405 = vsel %vm373, 0.0, %v341
        %v406 = vsel %vm374, 0.0, %v342
        %v407 = vsel %vm375, 0.0, %v343
        %v408 = vsel %vm376, 0.0, %v344
        %v409 = vsel %vm377, 0.0, %v345
        %v410 = vsel %vm378, 0.0, %v346
        %v411 = vsel %vm379, 0.0, %v347
        %v412 = vsel %vm380, 0.0, %v348
        %v413 = vsel %vm381, 0.0, %v349
        %v414 = vsel %vm382, 0.0, %v350
        %v415 = vsel %vm383, 0.0, %v351
        %v416 = vsel %vm384, 0.0, %v352
        %v417 = vsel %vm385, 0.0, %v353
        %v418 = vsel %vm386, 0.0, %v354
        %v419 = vsel %vm387, 0.0, %v355
        %v420 = vsel %vm388, 0.0, %v356
        %v421 = vsel %vm389, 0.0, %v357
        %v422 = vsel %vm390, 0.0, %v358
        %v423 = vsel %vm391, 0.0, %v359
        %v424 = vsel %vm392, 0.0, %v360
        %v425 = vsel %vm393, 0.0, %v361
        %v426 = vsel %vm394, 0.0, %v362
        %v427 = vsel %vm395, 0.0, %v363
        %v428 = vsel %vm396, 0.0, %v364
        %vm429 = vcmp.eq.f32.partialorder %v397, inf
        %vm430 = vcmp.eq.f32.partialorder %v398, inf
        %vm431 = vcmp.eq.f32.partialorder %v399, inf
        %vm432 = vcmp.eq.f32.partialorder %v400, inf
        %vm433 = vcmp.eq.f32.partialorder %v401, inf
        %vm434 = vcmp.eq.f32.partialorder %v402, inf
        %vm435 = vcmp.eq.f32.partialorder %v403, inf
        %vm436 = vcmp.eq.f32.partialorder %v404, inf
        %vm437 = vcmp.eq.f32.partialorder %v405, inf
        %vm438 = vcmp.eq.f32.partialorder %v406, inf
        %vm439 = vcmp.eq.f32.partialorder %v407, inf
        %vm440 = vcmp.eq.f32.partialorder %v408, inf
        %vm441 = vcmp.eq.f32.partialorder %v409, inf
        %vm442 = vcmp.eq.f32.partialorder %v410, inf
        %vm443 = vcmp.eq.f32.partialorder %v411, inf
        %vm444 = vcmp.eq.f32.partialorder %v412, inf
        %vm445 = vcmp.eq.f32.partialorder %v413, inf
        %vm446 = vcmp.eq.f32.partialorder %v414, inf
        %vm447 = vcmp.eq.f32.partialorder %v415, inf
        %vm448 = vcmp.eq.f32.partialorder %v416, inf
        %vm449 = vcmp.eq.f32.partialorder %v417, inf
        %vm450 = vcmp.eq.f32.partialorder %v418, inf
        %vm451 = vcmp.eq.f32.partialorder %v419, inf
        %vm452 = vcmp.eq.f32.partialorder %v420, inf
        %vm453 = vcmp.eq.f32.partialorder %v421, inf
        %vm454 = vcmp.eq.f32.partialorder %v422, inf
        %vm455 = vcmp.eq.f32.partialorder %v423, inf
        %vm456 = vcmp.eq.f32.partialorder %v424, inf
        %vm457 = vcmp.eq.f32.partialorder %v425, inf
        %vm458 = vcmp.eq.f32.partialorder %v426, inf
        %vm459 = vcmp.eq.f32.partialorder %v427, inf
        %vm460 = vcmp.eq.f32.partialorder %v428, inf
        %v461 = vsel %vm429, 3.4028235e+38, %v397
        %v462 = vsel %vm430, 3.4028235e+38, %v398
        %v463 = vsel %vm431, 3.4028235e+38, %v399
        %v464 = vsel %vm432, 3.4028235e+38, %v400
        %v465 = vsel %vm433, 3.4028235e+38, %v401
        %v466 = vsel %vm434, 3.4028235e+38, %v402
        %v467 = vsel %vm435, 3.4028235e+38, %v403
        %v468 = vsel %vm436, 3.4028235e+38, %v404
        %v469 = vsel %vm437, 3.4028235e+38, %v405
        %v470 = vsel %vm438, 3.4028235e+38, %v406
        %v471 = vsel %vm439, 3.4028235e+38, %v407
        %v472 = vsel %vm440, 3.4028235e+38, %v408
        %v473 = vsel %vm441, 3.4028235e+38, %v409
        %v474 = vsel %vm442, 3.4028235e+38, %v410
        %v475 = vsel %vm443, 3.4028235e+38, %v411
        %v476 = vsel %vm444, 3.4028235e+38, %v412
        %v477 = vsel %vm445, 3.4028235e+38, %v413
        %v478 = vsel %vm446, 3.4028235e+38, %v414
        %v479 = vsel %vm447, 3.4028235e+38, %v415
        %v480 = vsel %vm448, 3.4028235e+38, %v416
        %v481 = vsel %vm449, 3.4028235e+38, %v417
        %v482 = vsel %vm450, 3.4028235e+38, %v418
        %v483 = vsel %vm451, 3.4028235e+38, %v419
        %v484 = vsel %vm452, 3.4028235e+38, %v420
        %v485 = vsel %vm453, 3.4028235e+38, %v421
        %v486 = vsel %vm454, 3.4028235e+38, %v422
        %v487 = vsel %vm455, 3.4028235e+38, %v423
        %v488 = vsel %vm456, 3.4028235e+38, %v424
        %v489 = vsel %vm457, 3.4028235e+38, %v425
        %v490 = vsel %vm458, 3.4028235e+38, %v426
        %v491 = vsel %vm459, 3.4028235e+38, %v427
        %v492 = vsel %vm460, 3.4028235e+38, %v428
        %vm493 = vcmp.eq.f32.partialorder %v461, -inf
        %vm494 = vcmp.eq.f32.partialorder %v462, -inf
        %vm495 = vcmp.eq.f32.partialorder %v463, -inf
        %vm496 = vcmp.eq.f32.partialorder %v464, -inf
        %vm497 = vcmp.eq.f32.partialorder %v465, -inf
        %vm498 = vcmp.eq.f32.partialorder %v466, -inf
        %vm499 = vcmp.eq.f32.partialorder %v467, -inf
        %vm500 = vcmp.eq.f32.partialorder %v468, -inf
        %vm501 = vcmp.eq.f32.partialorder %v469, -inf
        %vm502 = vcmp.eq.f32.partialorder %v470, -inf
        %vm503 = vcmp.eq.f32.partialorder %v471, -inf
        %vm504 = vcmp.eq.f32.partialorder %v472, -inf
        %vm505 = vcmp.eq.f32.partialorder %v473, -inf
        %vm506 = vcmp.eq.f32.partialorder %v474, -inf
        %vm507 = vcmp.eq.f32.partialorder %v475, -inf
        %vm508 = vcmp.eq.f32.partialorder %v476, -inf
        %vm509 = vcmp.eq.f32.partialorder %v477, -inf
        %vm510 = vcmp.eq.f32.partialorder %v478, -inf
        %vm511 = vcmp.eq.f32.partialorder %v479, -inf
        %vm512 = vcmp.eq.f32.partialorder %v480, -inf
        %vm513 = vcmp.eq.f32.partialorder %v481, -inf
        %vm514 = vcmp.eq.f32.partialorder %v482, -inf
        %vm515 = vcmp.eq.f32.partialorder %v483, -inf
        %vm516 = vcmp.eq.f32.partialorder %v484, -inf
        %vm517 = vcmp.eq.f32.partialorder %v485, -inf
        %vm518 = vcmp.eq.f32.partialorder %v486, -inf
        %vm519 = vcmp.eq.f32.partialorder %v487, -inf
        %vm520 = vcmp.eq.f32.partialorder %v488, -inf
        %vm521 = vcmp.eq.f32.partialorder %v489, -inf
        %vm522 = vcmp.eq.f32.partialorder %v490, -inf
        %vm523 = vcmp.eq.f32.partialorder %v491, -inf
        %vm524 = vcmp.eq.f32.partialorder %v492, -inf
        %v525 = vsel %vm493, -3.4028235e+38, %v461
        %v526 = vsel %vm494, -3.4028235e+38, %v462
        %v527 = vsel %vm495, -3.4028235e+38, %v463
        %v528 = vsel %vm496, -3.4028235e+38, %v464
        %v529 = vsel %vm497, -3.4028235e+38, %v465
        %v530 = vsel %vm498, -3.4028235e+38, %v466
        %v531 = vsel %vm499, -3.4028235e+38, %v467
        %v532 = vsel %vm500, -3.4028235e+38, %v468
        %v533 = vsel %vm501, -3.4028235e+38, %v469
        %v534 = vsel %vm502, -3.4028235e+38, %v470
        %v535 = vsel %vm503, -3.4028235e+38, %v471
        %v536 = vsel %vm504, -3.4028235e+38, %v472
        %v537 = vsel %vm505, -3.4028235e+38, %v473
        %v538 = vsel %vm506, -3.4028235e+38, %v474
        %v539 = vsel %vm507, -3.4028235e+38, %v475
        %v540 = vsel %vm508, -3.4028235e+38, %v476
        %v541 = vsel %vm509, -3.4028235e+38, %v477
        %v542 = vsel %vm510, -3.4028235e+38, %v478
        %v543 = vsel %vm511, -3.4028235e+38, %v479
        %v544 = vsel %vm512, -3.4028235e+38, %v480
        %v545 = vsel %vm513, -3.4028235e+38, %v481
        %v546 = vsel %vm514, -3.4028235e+38, %v482
        %v547 = vsel %vm515, -3.4028235e+38, %v483
        %v548 = vsel %vm516, -3.4028235e+38, %v484
        %v549 = vsel %vm517, -3.4028235e+38, %v485
        %v550 = vsel %vm518, -3.4028235e+38, %v486
        %v551 = vsel %vm519, -3.4028235e+38, %v487
        %v552 = vsel %vm520, -3.4028235e+38, %v488
        %v553 = vsel %vm521, -3.4028235e+38, %v489
        %v554 = vsel %vm522, -3.4028235e+38, %v490
        %v555 = vsel %vm523, -3.4028235e+38, %v491
        %v556 = vsel %vm524, -3.4028235e+38, %v492
        %vm557 = vcmask 64512
        %v558 = vsel %vm557, %v525, 0.0
        %559 = vadd.xlane.f32.xlu0 %v558
        %v560 = vpop.xlane.xlu0 %559
        %v561 = vsel %vm557, %v526, 0.0
        %562 = vadd.xlane.f32.xlu0 %v561
        %v563 = vpop.xlane.xlu0 %562
        %v564 = vsel %vm557, %v527, 0.0
        %565 = vadd.xlane.f32.xlu0 %v564
        %v566 = vpop.xlane.xlu0 %565
        %v567 = vsel %vm557, %v528, 0.0
        %568 = vadd.xlane.f32.xlu0 %v567
        %v569 = vpop.xlane.xlu0 %568
        %v570 = vsel %vm557, %v529, 0.0
        %571 = vadd.xlane.f32.xlu0 %v570
        %v572 = vpop.xlane.xlu0 %571
        %v573 = vsel %vm557, %v530, 0.0
        %574 = vadd.xlane.f32.xlu0 %v573
        %v575 = vpop.xlane.xlu0 %574
        %v576 = vsel %vm557, %v531, 0.0
        %577 = vadd.xlane.f32.xlu0 %v576
        %v578 = vpop.xlane.xlu0 %577
        %v579 = vsel %vm557, %v532, 0.0
        %580 = vadd.xlane.f32.xlu0 %v579
        %v581 = vpop.xlane.xlu0 %580
        %v582 = vsel %vm557, %v533, 0.0
        %583 = vadd.xlane.f32.xlu0 %v582
        %v584 = vpop.xlane.xlu0 %583
        %v585 = vsel %vm557, %v534, 0.0
        %586 = vadd.xlane.f32.xlu0 %v585
        %v587 = vpop.xlane.xlu0 %586
        %v588 = vsel %vm557, %v535, 0.0
        %589 = vadd.xlane.f32.xlu0 %v588
        %v590 = vpop.xlane.xlu0 %589
        %v591 = vsel %vm557, %v536, 0.0
        %592 = vadd.xlane.f32.xlu0 %v591
        %v593 = vpop.xlane.xlu0 %592
        %v594 = vsel %vm557, %v537, 0.0
        %595 = vadd.xlane.f32.xlu0 %v594
        %v596 = vpop.xlane.xlu0 %595
        %v597 = vsel %vm557, %v538, 0.0
        %598 = vadd.xlane.f32.xlu0 %v597
        %v599 = vpop.xlane.xlu0 %598
        %v600 = vsel %vm557, %v539, 0.0
        %601 = vadd.xlane.f32.xlu0 %v600
        %v602 = vpop.xlane.xlu0 %601
        %v603 = vsel %vm557, %v540, 0.0
        %604 = vadd.xlane.f32.xlu0 %v603
        %v605 = vpop.xlane.xlu0 %604
        %v606 = vsel %vm557, %v541, 0.0
        %607 = vadd.xlane.f32.xlu0 %v606
        %v608 = vpop.xlane.xlu0 %607
        %v609 = vsel %vm557, %v542, 0.0
        %610 = vadd.xlane.f32.xlu0 %v609
        %v611 = vpop.xlane.xlu0 %610
        %v612 = vsel %vm557, %v543, 0.0
        %613 = vadd.xlane.f32.xlu0 %v612
        %v614 = vpop.xlane.xlu0 %613
        %v615 = vsel %vm557, %v544, 0.0
        %616 = vadd.xlane.f32.xlu0 %v615
        %v617 = vpop.xlane.xlu0 %616
        %v618 = vsel %vm557, %v545, 0.0
        %619 = vadd.xlane.f32.xlu0 %v618
        %v620 = vpop.xlane.xlu0 %619
        %v621 = vsel %vm557, %v546, 0.0
        %622 = vadd.xlane.f32.xlu0 %v621
        %v623 = vpop.xlane.xlu0 %622
        %v624 = vsel %vm557, %v547, 0.0
        %625 = vadd.xlane.f32.xlu0 %v624
        %v626 = vpop.xlane.xlu0 %625
        %v627 = vsel %vm557, %v548, 0.0
        %628 = vadd.xlane.f32.xlu0 %v627
        %v629 = vpop.xlane.xlu0 %628
        %v630 = vsel %vm557, %v549, 0.0
        %631 = vadd.xlane.f32.xlu0 %v630
        %v632 = vpop.xlane.xlu0 %631
        %v633 = vsel %vm557, %v550, 0.0
        %634 = vadd.xlane.f32.xlu0 %v633
        %v635 = vpop.xlane.xlu0 %634
        %v636 = vsel %vm557, %v551, 0.0
        %637 = vadd.xlane.f32.xlu0 %v636
        %v638 = vpop.xlane.xlu0 %637
        %v639 = vsel %vm557, %v552, 0.0
        %640 = vadd.xlane.f32.xlu0 %v639
        %v641 = vpop.xlane.xlu0 %640
        %v642 = vsel %vm557, %v553, 0.0
        %643 = vadd.xlane.f32.xlu0 %v642
        %v644 = vpop.xlane.xlu0 %643
        %v645 = vsel %vm557, %v554, 0.0
        %646 = vadd.xlane.f32.xlu0 %v645
        %v647 = vpop.xlane.xlu0 %646
        %v648 = vsel %vm557, %v555, 0.0
        %649 = vadd.xlane.f32.xlu0 %v648
        %v650 = vpop.xlane.xlu0 %649
        %v651 = vsel %vm557, %v556, 0.0
        %652 = vadd.xlane.f32.xlu0 %v651
        %v653 = vpop.xlane.xlu0 %652
        %v654 = vmul.f32 %v560, 0.125
        %v655 = vmul.f32 %v563, 0.125
        %v656 = vmul.f32 %v566, 0.125
        %v657 = vmul.f32 %v569, 0.125
        %v658 = vmul.f32 %v572, 0.125
        %v659 = vmul.f32 %v575, 0.125
        %v660 = vmul.f32 %v578, 0.125
        %v661 = vmul.f32 %v581, 0.125
        %v662 = vmul.f32 %v584, 0.125
        %v663 = vmul.f32 %v587, 0.125
        %v664 = vmul.f32 %v590, 0.125
        %v665 = vmul.f32 %v593, 0.125
        %v666 = vmul.f32 %v596, 0.125
        %v667 = vmul.f32 %v599, 0.125
        %v668 = vmul.f32 %v602, 0.125
        %v669 = vmul.f32 %v605, 0.125
        %v670 = vmul.f32 %v608, 0.125
        %v671 = vmul.f32 %v611, 0.125
        %v672 = vmul.f32 %v614, 0.125
        %v673 = vmul.f32 %v617, 0.125
        %v674 = vmul.f32 %v620, 0.125
        %v675 = vmul.f32 %v623, 0.125
        %v676 = vmul.f32 %v626, 0.125
        %v677 = vmul.f32 %v629, 0.125
        %v678 = vmul.f32 %v632, 0.125
        %v679 = vmul.f32 %v635, 0.125
        %v680 = vmul.f32 %v638, 0.125
        %v681 = vmul.f32 %v641, 0.125
        %v682 = vmul.f32 %v644, 0.125
        %v683 = vmul.f32 %v647, 0.125
        %v684 = vmul.f32 %v650, 0.125
        %v685 = vmul.f32 %v653, 0.125
        %v686 = vld [vmem:[%s266] sm:$0x3]
        %v719 = vlaneseq
        %v720 = vshrl.u32 %v719, 7
        %v721 = vsub.s32 0, %v720
        %v722 = vrot.slane %v654, %v721
        %v723 = vlaneseq
        %v724 = vshrl.u32 %v723, 7
        %v725 = vsub.s32 1, %v724
        %v726 = vrot.slane %v654, %v725
        %v727 = vlaneseq
        %v728 = vshrl.u32 %v727, 7
        %v729 = vsub.s32 2, %v728
        %v730 = vrot.slane %v654, %v729
        %v731 = vlaneseq
        %v732 = vshrl.u32 %v731, 7
        %v733 = vsub.s32 3, %v732
        %v734 = vrot.slane %v654, %v733
        %v735 = vlaneseq
        %v736 = vshrl.u32 %v735, 7
        %v737 = vsub.s32 4, %v736
        %v738 = vrot.slane %v654, %v737
        %v739 = vlaneseq
        %v740 = vshrl.u32 %v739, 7
        %v741 = vsub.s32 5, %v740
        %v742 = vrot.slane %v654, %v741
        %v743 = vlaneseq
        %v744 = vshrl.u32 %v743, 7
        %v745 = vsub.s32 6, %v744
        %v746 = vrot.slane %v654, %v745
        %v747 = vlaneseq
        %v748 = vshrl.u32 %v747, 7
        %v749 = vsub.s32 7, %v748
        %v750 = vrot.slane %v654, %v749
        %v751 = vlaneseq
        %v752 = vshrl.u32 %v751, 7
        %v753 = vsub.s32 0, %v752
        %v754 = vrot.slane %v655, %v753
        %v755 = vlaneseq
        %v756 = vshrl.u32 %v755, 7
        %v757 = vsub.s32 1, %v756
        %v758 = vrot.slane %v655, %v757
        %v759 = vlaneseq
        %v760 = vshrl.u32 %v759, 7
        %v761 = vsub.s32 2, %v760
        %v762 = vrot.slane %v655, %v761
        %v763 = vlaneseq
        %v764 = vshrl.u32 %v763, 7
        %v765 = vsub.s32 3, %v764
        %v766 = vrot.slane %v655, %v765
        %v767 = vlaneseq
        %v768 = vshrl.u32 %v767, 7
        %v769 = vsub.s32 4, %v768
        %v770 = vrot.slane %v655, %v769
        %v771 = vlaneseq
        %v772 = vshrl.u32 %v771, 7
        %v773 = vsub.s32 5, %v772
        %v774 = vrot.slane %v655, %v773
        %v775 = vlaneseq
        %v776 = vshrl.u32 %v775, 7
        %v777 = vsub.s32 6, %v776
        %v778 = vrot.slane %v655, %v777
        %v779 = vlaneseq
        %v780 = vshrl.u32 %v779, 7
        %v781 = vsub.s32 7, %v780
        %v782 = vrot.slane %v655, %v781
        %v783 = vlaneseq
        %v784 = vshrl.u32 %v783, 7
        %v785 = vsub.s32 0, %v784
        %v786 = vrot.slane %v656, %v785
        %v787 = vlaneseq
        %v788 = vshrl.u32 %v787, 7
        %v789 = vsub.s32 1, %v788
        %v790 = vrot.slane %v656, %v789
        %v791 = vlaneseq
        %v792 = vshrl.u32 %v791, 7
        %v793 = vsub.s32 2, %v792
        %v794 = vrot.slane %v656, %v793
        %v795 = vlaneseq
        %v796 = vshrl.u32 %v795, 7
        %v797 = vsub.s32 3, %v796
        %v798 = vrot.slane %v656, %v797
        %v799 = vlaneseq
        %v800 = vshrl.u32 %v799, 7
        %v801 = vsub.s32 4, %v800
        %v802 = vrot.slane %v656, %v801
        %v803 = vlaneseq
        %v804 = vshrl.u32 %v803, 7
        %v805 = vsub.s32 5, %v804
        %v806 = vrot.slane %v656, %v805
        %v807 = vlaneseq
        %v808 = vshrl.u32 %v807, 7
        %v809 = vsub.s32 6, %v808
        %v810 = vrot.slane %v656, %v809
        %v811 = vlaneseq
        %v812 = vshrl.u32 %v811, 7
        %v813 = vsub.s32 7, %v812
        %v814 = vrot.slane %v656, %v813
        %v815 = vlaneseq
        %v816 = vshrl.u32 %v815, 7
        %v817 = vsub.s32 0, %v816
        %v818 = vrot.slane %v657, %v817
        %v819 = vlaneseq
        %v820 = vshrl.u32 %v819, 7
        %v821 = vsub.s32 1, %v820
        %v822 = vrot.slane %v657, %v821
        %v823 = vlaneseq
        %v824 = vshrl.u32 %v823, 7
        %v825 = vsub.s32 2, %v824
        %v826 = vrot.slane %v657, %v825
        %v827 = vlaneseq
        %v828 = vshrl.u32 %v827, 7
        %v829 = vsub.s32 3, %v828
        %v830 = vrot.slane %v657, %v829
        %v831 = vlaneseq
        %v832 = vshrl.u32 %v831, 7
        %v833 = vsub.s32 4, %v832
        %v834 = vrot.slane %v657, %v833
        %v835 = vlaneseq
        %v836 = vshrl.u32 %v835, 7
        %v837 = vsub.s32 5, %v836
        %v838 = vrot.slane %v657, %v837
        %v839 = vlaneseq
        %v840 = vshrl.u32 %v839, 7
        %v841 = vsub.s32 6, %v840
        %v842 = vrot.slane %v657, %v841
        %v843 = vlaneseq
        %v844 = vshrl.u32 %v843, 7
        %v845 = vsub.s32 7, %v844
        %v846 = vrot.slane %v657, %v845
        %v847 = vlaneseq
        %v848 = vshrl.u32 %v847, 7
        %v849 = vsub.s32 0, %v848
        %v850 = vrot.slane %v658, %v849
        %v851 = vlaneseq
        %v852 = vshrl.u32 %v851, 7
        %v853 = vsub.s32 1, %v852
        %v854 = vrot.slane %v658, %v853
        %v855 = vlaneseq
        %v856 = vshrl.u32 %v855, 7
        %v857 = vsub.s32 2, %v856
        %v858 = vrot.slane %v658, %v857
        %v859 = vlaneseq
        %v860 = vshrl.u32 %v859, 7
        %v861 = vsub.s32 3, %v860
        %v862 = vrot.slane %v658, %v861
        %v863 = vlaneseq
        %v864 = vshrl.u32 %v863, 7
        %v865 = vsub.s32 4, %v864
        %v866 = vrot.slane %v658, %v865
        %v867 = vlaneseq
        %v868 = vshrl.u32 %v867, 7
        %v869 = vsub.s32 5, %v868
        %v870 = vrot.slane %v658, %v869
        %v871 = vlaneseq
        %v872 = vshrl.u32 %v871, 7
        %v873 = vsub.s32 6, %v872
        %v874 = vrot.slane %v658, %v873
        %v875 = vlaneseq
        %v876 = vshrl.u32 %v875, 7
        %v877 = vsub.s32 7, %v876
        %v878 = vrot.slane %v658, %v877
        %v879 = vlaneseq
        %v880 = vshrl.u32 %v879, 7
        %v881 = vsub.s32 0, %v880
        %v882 = vrot.slane %v659, %v881
        %v883 = vlaneseq
        %v884 = vshrl.u32 %v883, 7
        %v885 = vsub.s32 1, %v884
        %v886 = vrot.slane %v659, %v885
        %v887 = vlaneseq
        %v888 = vshrl.u32 %v887, 7
        %v889 = vsub.s32 2, %v888
        %v890 = vrot.slane %v659, %v889
        %v891 = vlaneseq
        %v892 = vshrl.u32 %v891, 7
        %v893 = vsub.s32 3, %v892
        %v894 = vrot.slane %v659, %v893
        %v895 = vlaneseq
        %v896 = vshrl.u32 %v895, 7
        %v897 = vsub.s32 4, %v896
        %v898 = vrot.slane %v659, %v897
        %v899 = vlaneseq
        %v900 = vshrl.u32 %v899, 7
        %v901 = vsub.s32 5, %v900
        %v902 = vrot.slane %v659, %v901
        %v903 = vlaneseq
        %v904 = vshrl.u32 %v903, 7
        %v905 = vsub.s32 6, %v904
        %v906 = vrot.slane %v659, %v905
        %v907 = vlaneseq
        %v908 = vshrl.u32 %v907, 7
        %v909 = vsub.s32 7, %v908
        %v910 = vrot.slane %v659, %v909
        %v911 = vlaneseq
        %v912 = vshrl.u32 %v911, 7
        %v913 = vsub.s32 0, %v912
        %v914 = vrot.slane %v660, %v913
        %v915 = vlaneseq
        %v916 = vshrl.u32 %v915, 7
        %v917 = vsub.s32 1, %v916
        %v918 = vrot.slane %v660, %v917
        %v919 = vlaneseq
        %v920 = vshrl.u32 %v919, 7
        %v921 = vsub.s32 2, %v920
        %v922 = vrot.slane %v660, %v921
        %v923 = vlaneseq
        %v924 = vshrl.u32 %v923, 7
        %v925 = vsub.s32 3, %v924
        %v926 = vrot.slane %v660, %v925
        %v927 = vlaneseq
        %v928 = vshrl.u32 %v927, 7
        %v929 = vsub.s32 4, %v928
        %v930 = vrot.slane %v660, %v929
        %v931 = vlaneseq
        %v932 = vshrl.u32 %v931, 7
        %v933 = vsub.s32 5, %v932
        %v934 = vrot.slane %v660, %v933
        %v935 = vlaneseq
        %v936 = vshrl.u32 %v935, 7
        %v937 = vsub.s32 6, %v936
        %v938 = vrot.slane %v660, %v937
        %v939 = vlaneseq
        %v940 = vshrl.u32 %v939, 7
        %v941 = vsub.s32 7, %v940
        %v942 = vrot.slane %v660, %v941
        %v943 = vlaneseq
        %v944 = vshrl.u32 %v943, 7
        %v945 = vsub.s32 0, %v944
        %v946 = vrot.slane %v661, %v945
        %v947 = vlaneseq
        %v948 = vshrl.u32 %v947, 7
        %v949 = vsub.s32 1, %v948
        %v950 = vrot.slane %v661, %v949
        %v951 = vlaneseq
        %v952 = vshrl.u32 %v951, 7
        %v953 = vsub.s32 2, %v952
        %v954 = vrot.slane %v661, %v953
        %v955 = vlaneseq
        %v956 = vshrl.u32 %v955, 7
        %v957 = vsub.s32 3, %v956
        %v958 = vrot.slane %v661, %v957
        %v959 = vlaneseq
        %v960 = vshrl.u32 %v959, 7
        %v961 = vsub.s32 4, %v960
        %v962 = vrot.slane %v661, %v961
        %v963 = vlaneseq
        %v964 = vshrl.u32 %v963, 7
        %v965 = vsub.s32 5, %v964
        %v966 = vrot.slane %v661, %v965
        %v967 = vlaneseq
        %v968 = vshrl.u32 %v967, 7
        %v969 = vsub.s32 6, %v968
        %v970 = vrot.slane %v661, %v969
        %v971 = vlaneseq
        %v972 = vshrl.u32 %v971, 7
        %v973 = vsub.s32 7, %v972
        %v974 = vrot.slane %v661, %v973
        %v975 = vlaneseq
        %v976 = vshrl.u32 %v975, 7
        %v977 = vsub.s32 0, %v976
        %v978 = vrot.slane %v662, %v977
        %v979 = vlaneseq
        %v980 = vshrl.u32 %v979, 7
        %v981 = vsub.s32 1, %v980
        %v982 = vrot.slane %v662, %v981
        %v983 = vlaneseq
        %v984 = vshrl.u32 %v983, 7
        %v985 = vsub.s32 2, %v984
        %v986 = vrot.slane %v662, %v985
        %v987 = vlaneseq
        %v988 = vshrl.u32 %v987, 7
        %v989 = vsub.s32 3, %v988
        %v990 = vrot.slane %v662, %v989
        %v991 = vlaneseq
        %v992 = vshrl.u32 %v991, 7
        %v993 = vsub.s32 4, %v992
        %v994 = vrot.slane %v662, %v993
        %v995 = vlaneseq
        %v996 = vshrl.u32 %v995, 7
        %v997 = vsub.s32 5, %v996
        %v998 = vrot.slane %v662, %v997
        %v999 = vlaneseq
        %v1000 = vshrl.u32 %v999, 7
        %v1001 = vsub.s32 6, %v1000
        %v1002 = vrot.slane %v662, %v1001
        %v1003 = vlaneseq
        %v1004 = vshrl.u32 %v1003, 7
        %v1005 = vsub.s32 7, %v1004
        %v1006 = vrot.slane %v662, %v1005
        %v1007 = vlaneseq
        %v1008 = vshrl.u32 %v1007, 7
        %v1009 = vsub.s32 0, %v1008
        %v1010 = vrot.slane %v663, %v1009
        %v1011 = vlaneseq
        %v1012 = vshrl.u32 %v1011, 7
        %v1013 = vsub.s32 1, %v1012
        %v1014 = vrot.slane %v663, %v1013
        %v1015 = vlaneseq
        %v1016 = vshrl.u32 %v1015, 7
        %v1017 = vsub.s32 2, %v1016
        %v1018 = vrot.slane %v663, %v1017
        %v1019 = vlaneseq
        %v1020 = vshrl.u32 %v1019, 7
        %v1021 = vsub.s32 3, %v1020
        %v1022 = vrot.slane %v663, %v1021
        %v1023 = vlaneseq
        %v1024 = vshrl.u32 %v1023, 7
        %v1025 = vsub.s32 4, %v1024
        %v1026 = vrot.slane %v663, %v1025
        %v1027 = vlaneseq
        %v1028 = vshrl.u32 %v1027, 7
        %v1029 = vsub.s32 5, %v1028
        %v1030 = vrot.slane %v663, %v1029
        %v1031 = vlaneseq
        %v1032 = vshrl.u32 %v1031, 7
        %v1033 = vsub.s32 6, %v1032
        %v1034 = vrot.slane %v663, %v1033
        %v1035 = vlaneseq
        %v1036 = vshrl.u32 %v1035, 7
        %v1037 = vsub.s32 7, %v1036
        %v1038 = vrot.slane %v663, %v1037
        %v1039 = vlaneseq
        %v1040 = vshrl.u32 %v1039, 7
        %v1041 = vsub.s32 0, %v1040
        %v1042 = vrot.slane %v664, %v1041
        %v1043 = vlaneseq
        %v1044 = vshrl.u32 %v1043, 7
        %v1045 = vsub.s32 1, %v1044
        %v1046 = vrot.slane %v664, %v1045
        %v1047 = vlaneseq
        %v1048 = vshrl.u32 %v1047, 7
        %v1049 = vsub.s32 2, %v1048
        %v1050 = vrot.slane %v664, %v1049
        %v1051 = vlaneseq
        %v1052 = vshrl.u32 %v1051, 7
        %v1053 = vsub.s32 3, %v1052
        %v1054 = vrot.slane %v664, %v1053
        %v1055 = vlaneseq
        %v1056 = vshrl.u32 %v1055, 7
        %v1057 = vsub.s32 4, %v1056
        %v1058 = vrot.slane %v664, %v1057
        %v1059 = vlaneseq
        %v1060 = vshrl.u32 %v1059, 7
        %v1061 = vsub.s32 5, %v1060
        %v1062 = vrot.slane %v664, %v1061
        %v1063 = vlaneseq
        %v1064 = vshrl.u32 %v1063, 7
        %v1065 = vsub.s32 6, %v1064
        %v1066 = vrot.slane %v664, %v1065
        %v1067 = vlaneseq
        %v1068 = vshrl.u32 %v1067, 7
        %v1069 = vsub.s32 7, %v1068
        %v1070 = vrot.slane %v664, %v1069
        %v1071 = vlaneseq
        %v1072 = vshrl.u32 %v1071, 7
        %v1073 = vsub.s32 0, %v1072
        %v1074 = vrot.slane %v665, %v1073
        %v1075 = vlaneseq
        %v1076 = vshrl.u32 %v1075, 7
        %v1077 = vsub.s32 1, %v1076
        %v1078 = vrot.slane %v665, %v1077
        %v1079 = vlaneseq
        %v1080 = vshrl.u32 %v1079, 7
        %v1081 = vsub.s32 2, %v1080
        %v1082 = vrot.slane %v665, %v1081
        %v1083 = vlaneseq
        %v1084 = vshrl.u32 %v1083, 7
        %v1085 = vsub.s32 3, %v1084
        %v1086 = vrot.slane %v665, %v1085
        %v1087 = vlaneseq
        %v1088 = vshrl.u32 %v1087, 7
        %v1089 = vsub.s32 4, %v1088
        %v1090 = vrot.slane %v665, %v1089
        %v1091 = vlaneseq
        %v1092 = vshrl.u32 %v1091, 7
        %v1093 = vsub.s32 5, %v1092
        %v1094 = vrot.slane %v665, %v1093
        %v1095 = vlaneseq
        %v1096 = vshrl.u32 %v1095, 7
        %v1097 = vsub.s32 6, %v1096
        %v1098 = vrot.slane %v665, %v1097
        %v1099 = vlaneseq
        %v1100 = vshrl.u32 %v1099, 7
        %v1101 = vsub.s32 7, %v1100
        %v1102 = vrot.slane %v665, %v1101
        %v1103 = vlaneseq
        %v1104 = vshrl.u32 %v1103, 7
        %v1105 = vsub.s32 0, %v1104
        %v1106 = vrot.slane %v666, %v1105
        %v1107 = vlaneseq
        %v1108 = vshrl.u32 %v1107, 7
        %v1109 = vsub.s32 1, %v1108
        %v1110 = vrot.slane %v666, %v1109
        %v1111 = vlaneseq
        %v1112 = vshrl.u32 %v1111, 7
        %v1113 = vsub.s32 2, %v1112
        %v1114 = vrot.slane %v666, %v1113
        %v1115 = vlaneseq
        %v1116 = vshrl.u32 %v1115, 7
        %v1117 = vsub.s32 3, %v1116
        %v1118 = vrot.slane %v666, %v1117
        %v1119 = vlaneseq
        %v1120 = vshrl.u32 %v1119, 7
        %v1121 = vsub.s32 4, %v1120
        %v1122 = vrot.slane %v666, %v1121
        %v1123 = vlaneseq
        %v1124 = vshrl.u32 %v1123, 7
        %v1125 = vsub.s32 5, %v1124
        %v1126 = vrot.slane %v666, %v1125
        %v1127 = vlaneseq
        %v1128 = vshrl.u32 %v1127, 7
        %v1129 = vsub.s32 6, %v1128
        %v1130 = vrot.slane %v666, %v1129
        %v1131 = vlaneseq
        %v1132 = vshrl.u32 %v1131, 7
        %v1133 = vsub.s32 7, %v1132
        %v1134 = vrot.slane %v666, %v1133
        %v1135 = vlaneseq
        %v1136 = vshrl.u32 %v1135, 7
        %v1137 = vsub.s32 0, %v1136
        %v1138 = vrot.slane %v667, %v1137
        %v1139 = vlaneseq
        %v1140 = vshrl.u32 %v1139, 7
        %v1141 = vsub.s32 1, %v1140
        %v1142 = vrot.slane %v667, %v1141
        %v1143 = vlaneseq
        %v1144 = vshrl.u32 %v1143, 7
        %v1145 = vsub.s32 2, %v1144
        %v1146 = vrot.slane %v667, %v1145
        %v1147 = vlaneseq
        %v1148 = vshrl.u32 %v1147, 7
        %v1149 = vsub.s32 3, %v1148
        %v1150 = vrot.slane %v667, %v1149
        %v1151 = vlaneseq
        %v1152 = vshrl.u32 %v1151, 7
        %v1153 = vsub.s32 4, %v1152
        %v1154 = vrot.slane %v667, %v1153
        %v1155 = vlaneseq
        %v1156 = vshrl.u32 %v1155, 7
        %v1157 = vsub.s32 5, %v1156
        %v1158 = vrot.slane %v667, %v1157
        %v1159 = vlaneseq
        %v1160 = vshrl.u32 %v1159, 7
        %v1161 = vsub.s32 6, %v1160
        %v1162 = vrot.slane %v667, %v1161
        %v1163 = vlaneseq
        %v1164 = vshrl.u32 %v1163, 7
        %v1165 = vsub.s32 7, %v1164
        %v1166 = vrot.slane %v667, %v1165
        %v1167 = vlaneseq
        %v1168 = vshrl.u32 %v1167, 7
        %v1169 = vsub.s32 0, %v1168
        %v1170 = vrot.slane %v668, %v1169
        %v1171 = vlaneseq
        %v1172 = vshrl.u32 %v1171, 7
        %v1173 = vsub.s32 1, %v1172
        %v1174 = vrot.slane %v668, %v1173
        %v1175 = vlaneseq
        %v1176 = vshrl.u32 %v1175, 7
        %v1177 = vsub.s32 2, %v1176
        %v1178 = vrot.slane %v668, %v1177
        %v1179 = vlaneseq
        %v1180 = vshrl.u32 %v1179, 7
        %v1181 = vsub.s32 3, %v1180
        %v1182 = vrot.slane %v668, %v1181
        %v1183 = vlaneseq
        %v1184 = vshrl.u32 %v1183, 7
        %v1185 = vsub.s32 4, %v1184
        %v1186 = vrot.slane %v668, %v1185
        %v1187 = vlaneseq
        %v1188 = vshrl.u32 %v1187, 7
        %v1189 = vsub.s32 5, %v1188
        %v1190 = vrot.slane %v668, %v1189
        %v1191 = vlaneseq
        %v1192 = vshrl.u32 %v1191, 7
        %v1193 = vsub.s32 6, %v1192
        %v1194 = vrot.slane %v668, %v1193
        %v1195 = vlaneseq
        %v1196 = vshrl.u32 %v1195, 7
        %v1197 = vsub.s32 7, %v1196
        %v1198 = vrot.slane %v668, %v1197
        %v1199 = vlaneseq
        %v1200 = vshrl.u32 %v1199, 7
        %v1201 = vsub.s32 0, %v1200
        %v1202 = vrot.slane %v669, %v1201
        %v1203 = vlaneseq
        %v1204 = vshrl.u32 %v1203, 7
        %v1205 = vsub.s32 1, %v1204
        %v1206 = vrot.slane %v669, %v1205
        %v1207 = vlaneseq
        %v1208 = vshrl.u32 %v1207, 7
        %v1209 = vsub.s32 2, %v1208
        %v1210 = vrot.slane %v669, %v1209
        %v1211 = vlaneseq
        %v1212 = vshrl.u32 %v1211, 7
        %v1213 = vsub.s32 3, %v1212
        %v1214 = vrot.slane %v669, %v1213
        %v1215 = vlaneseq
        %v1216 = vshrl.u32 %v1215, 7
        %v1217 = vsub.s32 4, %v1216
        %v1218 = vrot.slane %v669, %v1217
        %v1219 = vlaneseq
        %v1220 = vshrl.u32 %v1219, 7
        %v1221 = vsub.s32 5, %v1220
        %v1222 = vrot.slane %v669, %v1221
        %v1223 = vlaneseq
        %v1224 = vshrl.u32 %v1223, 7
        %v1225 = vsub.s32 6, %v1224
        %v1226 = vrot.slane %v669, %v1225
        %v1227 = vlaneseq
        %v1228 = vshrl.u32 %v1227, 7
        %v1229 = vsub.s32 7, %v1228
        %v1230 = vrot.slane %v669, %v1229
        %v1231 = vlaneseq
        %v1232 = vshrl.u32 %v1231, 7
        %v1233 = vsub.s32 0, %v1232
        %v1234 = vrot.slane %v670, %v1233
        %v1235 = vlaneseq
        %v1236 = vshrl.u32 %v1235, 7
        %v1237 = vsub.s32 1, %v1236
        %v1238 = vrot.slane %v670, %v1237
        %v1239 = vlaneseq
        %v1240 = vshrl.u32 %v1239, 7
        %v1241 = vsub.s32 2, %v1240
        %v1242 = vrot.slane %v670, %v1241
        %v1243 = vlaneseq
        %v1244 = vshrl.u32 %v1243, 7
        %v1245 = vsub.s32 3, %v1244
        %v1246 = vrot.slane %v670, %v1245
        %v1247 = vlaneseq
        %v1248 = vshrl.u32 %v1247, 7
        %v1249 = vsub.s32 4, %v1248
        %v1250 = vrot.slane %v670, %v1249
        %v1251 = vlaneseq
        %v1252 = vshrl.u32 %v1251, 7
        %v1253 = vsub.s32 5, %v1252
        %v1254 = vrot.slane %v670, %v1253
        %v1255 = vlaneseq
        %v1256 = vshrl.u32 %v1255, 7
        %v1257 = vsub.s32 6, %v1256
        %v1258 = vrot.slane %v670, %v1257
        %v1259 = vlaneseq
        %v1260 = vshrl.u32 %v1259, 7
        %v1261 = vsub.s32 7, %v1260
        %v1262 = vrot.slane %v670, %v1261
        %v1263 = vlaneseq
        %v1264 = vshrl.u32 %v1263, 7
        %v1265 = vsub.s32 0, %v1264
        %v1266 = vrot.slane %v671, %v1265
        %v1267 = vlaneseq
        %v1268 = vshrl.u32 %v1267, 7
        %v1269 = vsub.s32 1, %v1268
        %v1270 = vrot.slane %v671, %v1269
        %v1271 = vlaneseq
        %v1272 = vshrl.u32 %v1271, 7
        %v1273 = vsub.s32 2, %v1272
        %v1274 = vrot.slane %v671, %v1273
        %v1275 = vlaneseq
        %v1276 = vshrl.u32 %v1275, 7
        %v1277 = vsub.s32 3, %v1276
        %v1278 = vrot.slane %v671, %v1277
        %v1279 = vlaneseq
        %v1280 = vshrl.u32 %v1279, 7
        %v1281 = vsub.s32 4, %v1280
        %v1282 = vrot.slane %v671, %v1281
        %v1283 = vlaneseq
        %v1284 = vshrl.u32 %v1283, 7
        %v1285 = vsub.s32 5, %v1284
        %v1286 = vrot.slane %v671, %v1285
        %v1287 = vlaneseq
        %v1288 = vshrl.u32 %v1287, 7
        %v1289 = vsub.s32 6, %v1288
        %v1290 = vrot.slane %v671, %v1289
        %v1291 = vlaneseq
        %v1292 = vshrl.u32 %v1291, 7
        %v1293 = vsub.s32 7, %v1292
        %v1294 = vrot.slane %v671, %v1293
        %v1295 = vlaneseq
        %v1296 = vshrl.u32 %v1295, 7
        %v1297 = vsub.s32 0, %v1296
        %v1298 = vrot.slane %v672, %v1297
        %v1299 = vlaneseq
        %v1300 = vshrl.u32 %v1299, 7
        %v1301 = vsub.s32 1, %v1300
        %v1302 = vrot.slane %v672, %v1301
        %v1303 = vlaneseq
        %v1304 = vshrl.u32 %v1303, 7
        %v1305 = vsub.s32 2, %v1304
        %v1306 = vrot.slane %v672, %v1305
        %v1307 = vlaneseq
        %v1308 = vshrl.u32 %v1307, 7
        %v1309 = vsub.s32 3, %v1308
        %v1310 = vrot.slane %v672, %v1309
        %v1311 = vlaneseq
        %v1312 = vshrl.u32 %v1311, 7
        %v1313 = vsub.s32 4, %v1312
        %v1314 = vrot.slane %v672, %v1313
        %v1315 = vlaneseq
        %v1316 = vshrl.u32 %v1315, 7
        %v1317 = vsub.s32 5, %v1316
        %v1318 = vrot.slane %v672, %v1317
        %v1319 = vlaneseq
        %v1320 = vshrl.u32 %v1319, 7
        %v1321 = vsub.s32 6, %v1320
        %v1322 = vrot.slane %v672, %v1321
        %v1323 = vlaneseq
        %v1324 = vshrl.u32 %v1323, 7
        %v1325 = vsub.s32 7, %v1324
        %v1326 = vrot.slane %v672, %v1325
        %v1327 = vlaneseq
        %v1328 = vshrl.u32 %v1327, 7
        %v1329 = vsub.s32 0, %v1328
        %v1330 = vrot.slane %v673, %v1329
        %v1331 = vlaneseq
        %v1332 = vshrl.u32 %v1331, 7
        %v1333 = vsub.s32 1, %v1332
        %v1334 = vrot.slane %v673, %v1333
        %v1335 = vlaneseq
        %v1336 = vshrl.u32 %v1335, 7
        %v1337 = vsub.s32 2, %v1336
        %v1338 = vrot.slane %v673, %v1337
        %v1339 = vlaneseq
        %v1340 = vshrl.u32 %v1339, 7
        %v1341 = vsub.s32 3, %v1340
        %v1342 = vrot.slane %v673, %v1341
        %v1343 = vlaneseq
        %v1344 = vshrl.u32 %v1343, 7
        %v1345 = vsub.s32 4, %v1344
        %v1346 = vrot.slane %v673, %v1345
        %v1347 = vlaneseq
        %v1348 = vshrl.u32 %v1347, 7
        %v1349 = vsub.s32 5, %v1348
        %v1350 = vrot.slane %v673, %v1349
        %v1351 = vlaneseq
        %v1352 = vshrl.u32 %v1351, 7
        %v1353 = vsub.s32 6, %v1352
        %v1354 = vrot.slane %v673, %v1353
        %v1355 = vlaneseq
        %v1356 = vshrl.u32 %v1355, 7
        %v1357 = vsub.s32 7, %v1356
        %v1358 = vrot.slane %v673, %v1357
        %v1359 = vlaneseq
        %v1360 = vshrl.u32 %v1359, 7
        %v1361 = vsub.s32 0, %v1360
        %v1362 = vrot.slane %v674, %v1361
        %v1363 = vlaneseq
        %v1364 = vshrl.u32 %v1363, 7
        %v1365 = vsub.s32 1, %v1364
        %v1366 = vrot.slane %v674, %v1365
        %v1367 = vlaneseq
        %v1368 = vshrl.u32 %v1367, 7
        %v1369 = vsub.s32 2, %v1368
        %v1370 = vrot.slane %v674, %v1369
        %v1371 = vlaneseq
        %v1372 = vshrl.u32 %v1371, 7
        %v1373 = vsub.s32 3, %v1372
        %v1374 = vrot.slane %v674, %v1373
        %v1375 = vlaneseq
        %v1376 = vshrl.u32 %v1375, 7
        %v1377 = vsub.s32 4, %v1376
        %v1378 = vrot.slane %v674, %v1377
        %v1379 = vlaneseq
        %v1380 = vshrl.u32 %v1379, 7
        %v1381 = vsub.s32 5, %v1380
        %v1382 = vrot.slane %v674, %v1381
        %v1383 = vlaneseq
        %v1384 = vshrl.u32 %v1383, 7
        %v1385 = vsub.s32 6, %v1384
        %v1386 = vrot.slane %v674, %v1385
        %v1387 = vlaneseq
        %v1388 = vshrl.u32 %v1387, 7
        %v1389 = vsub.s32 7, %v1388
        %v1390 = vrot.slane %v674, %v1389
        %v1391 = vlaneseq
        %v1392 = vshrl.u32 %v1391, 7
        %v1393 = vsub.s32 0, %v1392
        %v1394 = vrot.slane %v675, %v1393
        %v1395 = vlaneseq
        %v1396 = vshrl.u32 %v1395, 7
        %v1397 = vsub.s32 1, %v1396
        %v1398 = vrot.slane %v675, %v1397
        %v1399 = vlaneseq
        %v1400 = vshrl.u32 %v1399, 7
        %v1401 = vsub.s32 2, %v1400
        %v1402 = vrot.slane %v675, %v1401
        %v1403 = vlaneseq
        %v1404 = vshrl.u32 %v1403, 7
        %v1405 = vsub.s32 3, %v1404
        %v1406 = vrot.slane %v675, %v1405
        %v1407 = vlaneseq
        %v1408 = vshrl.u32 %v1407, 7
        %v1409 = vsub.s32 4, %v1408
        %v1410 = vrot.slane %v675, %v1409
        %v1411 = vlaneseq
        %v1412 = vshrl.u32 %v1411, 7
        %v1413 = vsub.s32 5, %v1412
        %v1414 = vrot.slane %v675, %v1413
        %v1415 = vlaneseq
        %v1416 = vshrl.u32 %v1415, 7
        %v1417 = vsub.s32 6, %v1416
        %v1418 = vrot.slane %v675, %v1417
        %v1419 = vlaneseq
        %v1420 = vshrl.u32 %v1419, 7
        %v1421 = vsub.s32 7, %v1420
        %v1422 = vrot.slane %v675, %v1421
        %v1423 = vlaneseq
        %v1424 = vshrl.u32 %v1423, 7
        %v1425 = vsub.s32 0, %v1424
        %v1426 = vrot.slane %v676, %v1425
        %v1427 = vlaneseq
        %v1428 = vshrl.u32 %v1427, 7
        %v1429 = vsub.s32 1, %v1428
        %v1430 = vrot.slane %v676, %v1429
        %v1431 = vlaneseq
        %v1432 = vshrl.u32 %v1431, 7
        %v1433 = vsub.s32 2, %v1432
        %v1434 = vrot.slane %v676, %v1433
        %v1435 = vlaneseq
        %v1436 = vshrl.u32 %v1435, 7
        %v1437 = vsub.s32 3, %v1436
        %v1438 = vrot.slane %v676, %v1437
        %v1439 = vlaneseq
        %v1440 = vshrl.u32 %v1439, 7
        %v1441 = vsub.s32 4, %v1440
        %v1442 = vrot.slane %v676, %v1441
        %v1443 = vlaneseq
        %v1444 = vshrl.u32 %v1443, 7
        %v1445 = vsub.s32 5, %v1444
        %v1446 = vrot.slane %v676, %v1445
        %v1447 = vlaneseq
        %v1448 = vshrl.u32 %v1447, 7
        %v1449 = vsub.s32 6, %v1448
        %v1450 = vrot.slane %v676, %v1449
        %v1451 = vlaneseq
        %v1452 = vshrl.u32 %v1451, 7
        %v1453 = vsub.s32 7, %v1452
        %v1454 = vrot.slane %v676, %v1453
        %v1455 = vlaneseq
        %v1456 = vshrl.u32 %v1455, 7
        %v1457 = vsub.s32 0, %v1456
        %v1458 = vrot.slane %v677, %v1457
        %v1459 = vlaneseq
        %v1460 = vshrl.u32 %v1459, 7
        %v1461 = vsub.s32 1, %v1460
        %v1462 = vrot.slane %v677, %v1461
        %v1463 = vlaneseq
        %v1464 = vshrl.u32 %v1463, 7
        %v1465 = vsub.s32 2, %v1464
        %v1466 = vrot.slane %v677, %v1465
        %v1467 = vlaneseq
        %v1468 = vshrl.u32 %v1467, 7
        %v1469 = vsub.s32 3, %v1468
        %v1470 = vrot.slane %v677, %v1469
        %v1471 = vlaneseq
        %v1472 = vshrl.u32 %v1471, 7
        %v1473 = vsub.s32 4, %v1472
        %v1474 = vrot.slane %v677, %v1473
        %v1475 = vlaneseq
        %v1476 = vshrl.u32 %v1475, 7
        %v1477 = vsub.s32 5, %v1476
        %v1478 = vrot.slane %v677, %v1477
        %v1479 = vlaneseq
        %v1480 = vshrl.u32 %v1479, 7
        %v1481 = vsub.s32 6, %v1480
        %v1482 = vrot.slane %v677, %v1481
        %v1483 = vlaneseq
        %v1484 = vshrl.u32 %v1483, 7
        %v1485 = vsub.s32 7, %v1484
        %v1486 = vrot.slane %v677, %v1485
        %v1487 = vlaneseq
        %v1488 = vshrl.u32 %v1487, 7
        %v1489 = vsub.s32 0, %v1488
        %v1490 = vrot.slane %v678, %v1489
        %v1491 = vlaneseq
        %v1492 = vshrl.u32 %v1491, 7
        %v1493 = vsub.s32 1, %v1492
        %v1494 = vrot.slane %v678, %v1493
        %v1495 = vlaneseq
        %v1496 = vshrl.u32 %v1495, 7
        %v1497 = vsub.s32 2, %v1496
        %v1498 = vrot.slane %v678, %v1497
        %v1499 = vlaneseq
        %v1500 = vshrl.u32 %v1499, 7
        %v1501 = vsub.s32 3, %v1500
        %v1502 = vrot.slane %v678, %v1501
        %v1503 = vlaneseq
        %v1504 = vshrl.u32 %v1503, 7
        %v1505 = vsub.s32 4, %v1504
        %v1506 = vrot.slane %v678, %v1505
        %v1507 = vlaneseq
        %v1508 = vshrl.u32 %v1507, 7
        %v1509 = vsub.s32 5, %v1508
        %v1510 = vrot.slane %v678, %v1509
        %v1511 = vlaneseq
        %v1512 = vshrl.u32 %v1511, 7
        %v1513 = vsub.s32 6, %v1512
        %v1514 = vrot.slane %v678, %v1513
        %v1515 = vlaneseq
        %v1516 = vshrl.u32 %v1515, 7
        %v1517 = vsub.s32 7, %v1516
        %v1518 = vrot.slane %v678, %v1517
        %v1519 = vlaneseq
        %v1520 = vshrl.u32 %v1519, 7
        %v1521 = vsub.s32 0, %v1520
        %v1522 = vrot.slane %v679, %v1521
        %v1523 = vlaneseq
        %v1524 = vshrl.u32 %v1523, 7
        %v1525 = vsub.s32 1, %v1524
        %v1526 = vrot.slane %v679, %v1525
        %v1527 = vlaneseq
        %v1528 = vshrl.u32 %v1527, 7
        %v1529 = vsub.s32 2, %v1528
        %v1530 = vrot.slane %v679, %v1529
        %v1531 = vlaneseq
        %v1532 = vshrl.u32 %v1531, 7
        %v1533 = vsub.s32 3, %v1532
        %v1534 = vrot.slane %v679, %v1533
        %v1535 = vlaneseq
        %v1536 = vshrl.u32 %v1535, 7
        %v1537 = vsub.s32 4, %v1536
        %v1538 = vrot.slane %v679, %v1537
        %v1539 = vlaneseq
        %v1540 = vshrl.u32 %v1539, 7
        %v1541 = vsub.s32 5, %v1540
        %v1542 = vrot.slane %v679, %v1541
        %v1543 = vlaneseq
        %v1544 = vshrl.u32 %v1543, 7
        %v1545 = vsub.s32 6, %v1544
        %v1546 = vrot.slane %v679, %v1545
        %v1547 = vlaneseq
        %v1548 = vshrl.u32 %v1547, 7
        %v1549 = vsub.s32 7, %v1548
        %v1550 = vrot.slane %v679, %v1549
        %v1551 = vlaneseq
        %v1552 = vshrl.u32 %v1551, 7
        %v1553 = vsub.s32 0, %v1552
        %v1554 = vrot.slane %v680, %v1553
        %v1555 = vlaneseq
        %v1556 = vshrl.u32 %v1555, 7
        %v1557 = vsub.s32 1, %v1556
        %v1558 = vrot.slane %v680, %v1557
        %v1559 = vlaneseq
        %v1560 = vshrl.u32 %v1559, 7
        %v1561 = vsub.s32 2, %v1560
        %v1562 = vrot.slane %v680, %v1561
        %v1563 = vlaneseq
        %v1564 = vshrl.u32 %v1563, 7
        %v1565 = vsub.s32 3, %v1564
        %v1566 = vrot.slane %v680, %v1565
        %v1567 = vlaneseq
        %v1568 = vshrl.u32 %v1567, 7
        %v1569 = vsub.s32 4, %v1568
        %v1570 = vrot.slane %v680, %v1569
        %v1571 = vlaneseq
        %v1572 = vshrl.u32 %v1571, 7
        %v1573 = vsub.s32 5, %v1572
        %v1574 = vrot.slane %v680, %v1573
        %v1575 = vlaneseq
        %v1576 = vshrl.u32 %v1575, 7
        %v1577 = vsub.s32 6, %v1576
        %v1578 = vrot.slane %v680, %v1577
        %v1579 = vlaneseq
        %v1580 = vshrl.u32 %v1579, 7
        %v1581 = vsub.s32 7, %v1580
        %v1582 = vrot.slane %v680, %v1581
        %v1583 = vlaneseq
        %v1584 = vshrl.u32 %v1583, 7
        %v1585 = vsub.s32 0, %v1584
        %v1586 = vrot.slane %v681, %v1585
        %v1587 = vlaneseq
        %v1588 = vshrl.u32 %v1587, 7
        %v1589 = vsub.s32 1, %v1588
        %v1590 = vrot.slane %v681, %v1589
        %v1591 = vlaneseq
        %v1592 = vshrl.u32 %v1591, 7
        %v1593 = vsub.s32 2, %v1592
        %v1594 = vrot.slane %v681, %v1593
        %v1595 = vlaneseq
        %v1596 = vshrl.u32 %v1595, 7
        %v1597 = vsub.s32 3, %v1596
        %v1598 = vrot.slane %v681, %v1597
        %v1599 = vlaneseq
        %v1600 = vshrl.u32 %v1599, 7
        %v1601 = vsub.s32 4, %v1600
        %v1602 = vrot.slane %v681, %v1601
        %v1603 = vlaneseq
        %v1604 = vshrl.u32 %v1603, 7
        %v1605 = vsub.s32 5, %v1604
        %v1606 = vrot.slane %v681, %v1605
        %v1607 = vlaneseq
        %v1608 = vshrl.u32 %v1607, 7
        %v1609 = vsub.s32 6, %v1608
        %v1610 = vrot.slane %v681, %v1609
        %v1611 = vlaneseq
        %v1612 = vshrl.u32 %v1611, 7
        %v1613 = vsub.s32 7, %v1612
        %v1614 = vrot.slane %v681, %v1613
        %v1615 = vlaneseq
        %v1616 = vshrl.u32 %v1615, 7
        %v1617 = vsub.s32 0, %v1616
        %v1618 = vrot.slane %v682, %v1617
        %v1619 = vlaneseq
        %v1620 = vshrl.u32 %v1619, 7
        %v1621 = vsub.s32 1, %v1620
        %v1622 = vrot.slane %v682, %v1621
        %v1623 = vlaneseq
        %v1624 = vshrl.u32 %v1623, 7
        %v1625 = vsub.s32 2, %v1624
        %v1626 = vrot.slane %v682, %v1625
        %v1627 = vlaneseq
        %v1628 = vshrl.u32 %v1627, 7
        %v1629 = vsub.s32 3, %v1628
        %v1630 = vrot.slane %v682, %v1629
        %v1631 = vlaneseq
        %v1632 = vshrl.u32 %v1631, 7
        %v1633 = vsub.s32 4, %v1632
        %v1634 = vrot.slane %v682, %v1633
        %v1635 = vlaneseq
        %v1636 = vshrl.u32 %v1635, 7
        %v1637 = vsub.s32 5, %v1636
        %v1638 = vrot.slane %v682, %v1637
        %v1639 = vlaneseq
        %v1640 = vshrl.u32 %v1639, 7
        %v1641 = vsub.s32 6, %v1640
        %v1642 = vrot.slane %v682, %v1641
        %v1643 = vlaneseq
        %v1644 = vshrl.u32 %v1643, 7
        %v1645 = vsub.s32 7, %v1644
        %v1646 = vrot.slane %v682, %v1645
        %v1647 = vlaneseq
        %v1648 = vshrl.u32 %v1647, 7
        %v1649 = vsub.s32 0, %v1648
        %v1650 = vrot.slane %v683, %v1649
        %v1651 = vlaneseq
        %v1652 = vshrl.u32 %v1651, 7
        %v1653 = vsub.s32 1, %v1652
        %v1654 = vrot.slane %v683, %v1653
        %v1655 = vlaneseq
        %v1656 = vshrl.u32 %v1655, 7
        %v1657 = vsub.s32 2, %v1656
        %v1658 = vrot.slane %v683, %v1657
        %v1659 = vlaneseq
        %v1660 = vshrl.u32 %v1659, 7
        %v1661 = vsub.s32 3, %v1660
        %v1662 = vrot.slane %v683, %v1661
        %v1663 = vlaneseq
        %v1664 = vshrl.u32 %v1663, 7
        %v1665 = vsub.s32 4, %v1664
        %v1666 = vrot.slane %v683, %v1665
        %v1667 = vlaneseq
        %v1668 = vshrl.u32 %v1667, 7
        %v1669 = vsub.s32 5, %v1668
        %v1670 = vrot.slane %v683, %v1669
        %v1671 = vlaneseq
        %v1672 = vshrl.u32 %v1671, 7
        %v1673 = vsub.s32 6, %v1672
        %v1674 = vrot.slane %v683, %v1673
        %v1675 = vlaneseq
        %v1676 = vshrl.u32 %v1675, 7
        %v1677 = vsub.s32 7, %v1676
        %v1678 = vrot.slane %v683, %v1677
        %v1679 = vlaneseq
        %v1680 = vshrl.u32 %v1679, 7
        %v1681 = vsub.s32 0, %v1680
        %v1682 = vrot.slane %v684, %v1681
        %v1683 = vlaneseq
        %v1684 = vshrl.u32 %v1683, 7
        %v1685 = vsub.s32 1, %v1684
        %v1686 = vrot.slane %v684, %v1685
        %v1687 = vlaneseq
        %v1688 = vshrl.u32 %v1687, 7
        %v1689 = vsub.s32 2, %v1688
        %v1690 = vrot.slane %v684, %v1689
        %v1691 = vlaneseq
        %v1692 = vshrl.u32 %v1691, 7
        %v1693 = vsub.s32 3, %v1692
        %v1694 = vrot.slane %v684, %v1693
        %v1695 = vlaneseq
        %v1696 = vshrl.u32 %v1695, 7
        %v1697 = vsub.s32 4, %v1696
        %v1698 = vrot.slane %v684, %v1697
        %v1699 = vlaneseq
        %v1700 = vshrl.u32 %v1699, 7
        %v1701 = vsub.s32 5, %v1700
        %v1702 = vrot.slane %v684, %v1701
        %v1703 = vlaneseq
        %v1704 = vshrl.u32 %v1703, 7
        %v1705 = vsub.s32 6, %v1704
        %v1706 = vrot.slane %v684, %v1705
        %v1707 = vlaneseq
        %v1708 = vshrl.u32 %v1707, 7
        %v1709 = vsub.s32 7, %v1708
        %v1710 = vrot.slane %v684, %v1709
        %v1711 = vlaneseq
        %v1712 = vshrl.u32 %v1711, 7
        %v1713 = vsub.s32 0, %v1712
        %v1714 = vrot.slane %v685, %v1713
        %v1715 = vlaneseq
        %v1716 = vshrl.u32 %v1715, 7
        %v1717 = vsub.s32 1, %v1716
        %v1718 = vrot.slane %v685, %v1717
        %v1719 = vlaneseq
        %v1720 = vshrl.u32 %v1719, 7
        %v1721 = vsub.s32 2, %v1720
        %v1722 = vrot.slane %v685, %v1721
        %v1723 = vlaneseq
        %v1724 = vshrl.u32 %v1723, 7
        %v1725 = vsub.s32 3, %v1724
        %v1726 = vrot.slane %v685, %v1725
        %v1727 = vlaneseq
        %v1728 = vshrl.u32 %v1727, 7
        %v1729 = vsub.s32 4, %v1728
        %v1730 = vrot.slane %v685, %v1729
        %v1731 = vlaneseq
        %v1732 = vshrl.u32 %v1731, 7
        %v1733 = vsub.s32 5, %v1732
        %v1734 = vrot.slane %v685, %v1733
        %v1735 = vlaneseq
        %v1736 = vshrl.u32 %v1735, 7
        %v1737 = vsub.s32 6, %v1736
        %v1738 = vrot.slane %v685, %v1737
        %v1739 = vlaneseq
        %v1740 = vshrl.u32 %v1739, 7
        %v1741 = vsub.s32 7, %v1740
        %v1742 = vrot.slane %v685, %v1741
        %v1743 = vcombine.low %v722, %v726
        %v1744 = vcombine.low %v730, %v734
        %v1745 = vcombine.low %v738, %v742
        %v1746 = vcombine.low %v746, %v750
        %v1748 = vunpack.c.l.s4 1966171168
        %v1749 = vunpack.c.0.s8 %v1748
        %v1750 = vlaneseq
        %v1751 = vshrl.u32 %v1750, 7
        %v1752 = vsub.s32 %v1749, %v1751
        %v1753 = vrot.slane %v1743, %v1752
        %v1755 = vunpack.c.l.s4 1966171168
        %v1756 = vunpack.c.0.s8 %v1755
        %v1757 = vlaneseq
        %v1758 = vshrl.u32 %v1757, 7
        %v1759 = vsub.s32 %v1756, %v1758
        %v1760 = vrot.slane %v1744, %v1759
        %v1762 = vunpack.c.l.s4 1966171168
        %v1763 = vunpack.c.0.s8 %v1762
        %v1764 = vlaneseq
        %v1765 = vshrl.u32 %v1764, 7
        %v1766 = vsub.s32 %v1763, %v1765
        %v1767 = vrot.slane %v1745, %v1766
        %v1769 = vunpack.c.l.s4 1966171168
        %v1770 = vunpack.c.0.s8 %v1769
        %v1771 = vlaneseq
        %v1772 = vshrl.u32 %v1771, 7
        %v1773 = vsub.s32 %v1770, %v1772
        %v1774 = vrot.slane %v1746, %v1773
        %v1775 = vcombine.low %v1753, %v1760
        %v1776 = vcombine.low %v1767, %v1774
        %v1778 = vunpack.c.l.s4 1966171168
        %v1779 = vunpack.c.0.s8 %v1778
        %v1780 = vlaneseq
        %v1781 = vshrl.u32 %v1780, 7
        %v1782 = vsub.s32 %v1779, %v1781
        %v1783 = vrot.slane %v1775, %v1782
        %v1785 = vunpack.c.l.s4 1966171168
        %v1786 = vunpack.c.0.s8 %v1785
        %v1787 = vlaneseq
        %v1788 = vshrl.u32 %v1787, 7
        %v1789 = vsub.s32 %v1786, %v1788
        %v1790 = vrot.slane %v1776, %v1789
        %v1791 = vcombine.low %v1783, %v1790
        %v1792 = vcombine.low %v754, %v758
        %v1793 = vcombine.low %v762, %v766
        %v1794 = vcombine.low %v770, %v774
        %v1795 = vcombine.low %v778, %v782
        %v1797 = vunpack.c.l.s4 1966171168
        %v1798 = vunpack.c.0.s8 %v1797
        %v1799 = vlaneseq
        %v1800 = vshrl.u32 %v1799, 7
        %v1801 = vsub.s32 %v1798, %v1800
        %v1802 = vrot.slane %v1792, %v1801
        %v1804 = vunpack.c.l.s4 1966171168
        %v1805 = vunpack.c.0.s8 %v1804
        %v1806 = vlaneseq
        %v1807 = vshrl.u32 %v1806, 7
        %v1808 = vsub.s32 %v1805, %v1807
        %v1809 = vrot.slane %v1793, %v1808
        %v1811 = vunpack.c.l.s4 1966171168
        %v1812 = vunpack.c.0.s8 %v1811
        %v1813 = vlaneseq
        %v1814 = vshrl.u32 %v1813, 7
        %v1815 = vsub.s32 %v1812, %v1814
        %v1816 = vrot.slane %v1794, %v1815
        %v1818 = vunpack.c.l.s4 1966171168
        %v1819 = vunpack.c.0.s8 %v1818
        %v1820 = vlaneseq
        %v1821 = vshrl.u32 %v1820, 7
        %v1822 = vsub.s32 %v1819, %v1821
        %v1823 = vrot.slane %v1795, %v1822
        %v1824 = vcombine.low %v1802, %v1809
        %v1825 = vcombine.low %v1816, %v1823
        %v1827 = vunpack.c.l.s4 1966171168
        %v1828 = vunpack.c.0.s8 %v1827
        %v1829 = vlaneseq
        %v1830 = vshrl.u32 %v1829, 7
        %v1831 = vsub.s32 %v1828, %v1830
        %v1832 = vrot.slane %v1824, %v1831
        %v1834 = vunpack.c.l.s4 1966171168
        %v1835 = vunpack.c.0.s8 %v1834
        %v1836 = vlaneseq
        %v1837 = vshrl.u32 %v1836, 7
        %v1838 = vsub.s32 %v1835, %v1837
        %v1839 = vrot.slane %v1825, %v1838
        %v1840 = vcombine.low %v1832, %v1839
        %v1841 = vcombine.low %v786, %v790
        %v1842 = vcombine.low %v794, %v798
        %v1843 = vcombine.low %v802, %v806
        %v1844 = vcombine.low %v810, %v814
        %v1846 = vunpack.c.l.s4 1966171168
        %v1847 = vunpack.c.0.s8 %v1846
        %v1848 = vlaneseq
        %v1849 = vshrl.u32 %v1848, 7
        %v1850 = vsub.s32 %v1847, %v1849
        %v1851 = vrot.slane %v1841, %v1850
        %v1853 = vunpack.c.l.s4 1966171168
        %v1854 = vunpack.c.0.s8 %v1853
        %v1855 = vlaneseq
        %v1856 = vshrl.u32 %v1855, 7
        %v1857 = vsub.s32 %v1854, %v1856
        %v1858 = vrot.slane %v1842, %v1857
        %v1860 = vunpack.c.l.s4 1966171168
        %v1861 = vunpack.c.0.s8 %v1860
        %v1862 = vlaneseq
        %v1863 = vshrl.u32 %v1862, 7
        %v1864 = vsub.s32 %v1861, %v1863
        %v1865 = vrot.slane %v1843, %v1864
        %v1867 = vunpack.c.l.s4 1966171168
        %v1868 = vunpack.c.0.s8 %v1867
        %v1869 = vlaneseq
        %v1870 = vshrl.u32 %v1869, 7
        %v1871 = vsub.s32 %v1868, %v1870
        %v1872 = vrot.slane %v1844, %v1871
        %v1873 = vcombine.low %v1851, %v1858
        %v1874 = vcombine.low %v1865, %v1872
        %v1876 = vunpack.c.l.s4 1966171168
        %v1877 = vunpack.c.0.s8 %v1876
        %v1878 = vlaneseq
        %v1879 = vshrl.u32 %v1878, 7
        %v1880 = vsub.s32 %v1877, %v1879
        %v1881 = vrot.slane %v1873, %v1880
        %v1883 = vunpack.c.l.s4 1966171168
        %v1884 = vunpack.c.0.s8 %v1883
        %v1885 = vlaneseq
        %v1886 = vshrl.u32 %v1885, 7
        %v1887 = vsub.s32 %v1884, %v1886
        %v1888 = vrot.slane %v1874, %v1887
        %v1889 = vcombine.low %v1881, %v1888
        %v1890 = vcombine.low %v818, %v822
        %v1891 = vcombine.low %v826, %v830
        %v1892 = vcombine.low %v834, %v838
        %v1893 = vcombine.low %v842, %v846
        %v1895 = vunpack.c.l.s4 1966171168
        %v1896 = vunpack.c.0.s8 %v1895
        %v1897 = vlaneseq
        %v1898 = vshrl.u32 %v1897, 7
        %v1899 = vsub.s32 %v1896, %v1898
        %v1900 = vrot.slane %v1890, %v1899
        %v1902 = vunpack.c.l.s4 1966171168
        %v1903 = vunpack.c.0.s8 %v1902
        %v1904 = vlaneseq
        %v1905 = vshrl.u32 %v1904, 7
        %v1906 = vsub.s32 %v1903, %v1905
        %v1907 = vrot.slane %v1891, %v1906
        %v1909 = vunpack.c.l.s4 1966171168
        %v1910 = vunpack.c.0.s8 %v1909
        %v1911 = vlaneseq
        %v1912 = vshrl.u32 %v1911, 7
        %v1913 = vsub.s32 %v1910, %v1912
        %v1914 = vrot.slane %v1892, %v1913
        %v1916 = vunpack.c.l.s4 1966171168
        %v1917 = vunpack.c.0.s8 %v1916
        %v1918 = vlaneseq
        %v1919 = vshrl.u32 %v1918, 7
        %v1920 = vsub.s32 %v1917, %v1919
        %v1921 = vrot.slane %v1893, %v1920
        %v1922 = vcombine.low %v1900, %v1907
        %v1923 = vcombine.low %v1914, %v1921
        %v1925 = vunpack.c.l.s4 1966171168
        %v1926 = vunpack.c.0.s8 %v1925
        %v1927 = vlaneseq
        %v1928 = vshrl.u32 %v1927, 7
        %v1929 = vsub.s32 %v1926, %v1928
        %v1930 = vrot.slane %v1922, %v1929
        %v1932 = vunpack.c.l.s4 1966171168
        %v1933 = vunpack.c.0.s8 %v1932
        %v1934 = vlaneseq
        %v1935 = vshrl.u32 %v1934, 7
        %v1936 = vsub.s32 %v1933, %v1935
        %v1937 = vrot.slane %v1923, %v1936
        %v1938 = vcombine.low %v1930, %v1937
        %v1939 = vcombine.low %v850, %v854
        %v1940 = vcombine.low %v858, %v862
        %v1941 = vcombine.low %v866, %v870
        %v1942 = vcombine.low %v874, %v878
        %v1944 = vunpack.c.l.s4 1966171168
        %v1945 = vunpack.c.0.s8 %v1944
        %v1946 = vlaneseq
        %v1947 = vshrl.u32 %v1946, 7
        %v1948 = vsub.s32 %v1945, %v1947
        %v1949 = vrot.slane %v1939, %v1948
        %v1951 = vunpack.c.l.s4 1966171168
        %v1952 = vunpack.c.0.s8 %v1951
        %v1953 = vlaneseq
        %v1954 = vshrl.u32 %v1953, 7
        %v1955 = vsub.s32 %v1952, %v1954
        %v1956 = vrot.slane %v1940, %v1955
        %v1958 = vunpack.c.l.s4 1966171168
        %v1959 = vunpack.c.0.s8 %v1958
        %v1960 = vlaneseq
        %v1961 = vshrl.u32 %v1960, 7
        %v1962 = vsub.s32 %v1959, %v1961
        %v1963 = vrot.slane %v1941, %v1962
        %v1965 = vunpack.c.l.s4 1966171168
        %v1966 = vunpack.c.0.s8 %v1965
        %v1967 = vlaneseq
        %v1968 = vshrl.u32 %v1967, 7
        %v1969 = vsub.s32 %v1966, %v1968
        %v1970 = vrot.slane %v1942, %v1969
        %v1971 = vcombine.low %v1949, %v1956
        %v1972 = vcombine.low %v1963, %v1970
        %v1974 = vunpack.c.l.s4 1966171168
        %v1975 = vunpack.c.0.s8 %v1974
        %v1976 = vlaneseq
        %v1977 = vshrl.u32 %v1976, 7
        %v1978 = vsub.s32 %v1975, %v1977
        %v1979 = vrot.slane %v1971, %v1978
        %v1981 = vunpack.c.l.s4 1966171168
        %v1982 = vunpack.c.0.s8 %v1981
        %v1983 = vlaneseq
        %v1984 = vshrl.u32 %v1983, 7
        %v1985 = vsub.s32 %v1982, %v1984
        %v1986 = vrot.slane %v1972, %v1985
        %v1987 = vcombine.low %v1979, %v1986
        %v1988 = vcombine.low %v882, %v886
        %v1989 = vcombine.low %v890, %v894
        %v1990 = vcombine.low %v898, %v902
        %v1991 = vcombine.low %v906, %v910
        %v1993 = vunpack.c.l.s4 1966171168
        %v1994 = vunpack.c.0.s8 %v1993
        %v1995 = vlaneseq
        %v1996 = vshrl.u32 %v1995, 7
        %v1997 = vsub.s32 %v1994, %v1996
        %v1998 = vrot.slane %v1988, %v1997
        %v2000 = vunpack.c.l.s4 1966171168
        %v2001 = vunpack.c.0.s8 %v2000
        %v2002 = vlaneseq
        %v2003 = vshrl.u32 %v2002, 7
        %v2004 = vsub.s32 %v2001, %v2003
        %v2005 = vrot.slane %v1989, %v2004
        %v2007 = vunpack.c.l.s4 1966171168
        %v2008 = vunpack.c.0.s8 %v2007
        %v2009 = vlaneseq
        %v2010 = vshrl.u32 %v2009, 7
        %v2011 = vsub.s32 %v2008, %v2010
        %v2012 = vrot.slane %v1990, %v2011
        %v2014 = vunpack.c.l.s4 1966171168
        %v2015 = vunpack.c.0.s8 %v2014
        %v2016 = vlaneseq
        %v2017 = vshrl.u32 %v2016, 7
        %v2018 = vsub.s32 %v2015, %v2017
        %v2019 = vrot.slane %v1991, %v2018
        %v2020 = vcombine.low %v1998, %v2005
        %v2021 = vcombine.low %v2012, %v2019
        %v2023 = vunpack.c.l.s4 1966171168
        %v2024 = vunpack.c.0.s8 %v2023
        %v2025 = vlaneseq
        %v2026 = vshrl.u32 %v2025, 7
        %v2027 = vsub.s32 %v2024, %v2026
        %v2028 = vrot.slane %v2020, %v2027
        %v2030 = vunpack.c.l.s4 1966171168
        %v2031 = vunpack.c.0.s8 %v2030
        %v2032 = vlaneseq
        %v2033 = vshrl.u32 %v2032, 7
        %v2034 = vsub.s32 %v2031, %v2033
        %v2035 = vrot.slane %v2021, %v2034
        %v2036 = vcombine.low %v2028, %v2035
        %v2037 = vcombine.low %v914, %v918
        %v2038 = vcombine.low %v922, %v926
        %v2039 = vcombine.low %v930, %v934
        %v2040 = vcombine.low %v938, %v942
        %v2042 = vunpack.c.l.s4 1966171168
        %v2043 = vunpack.c.0.s8 %v2042
        %v2044 = vlaneseq
        %v2045 = vshrl.u32 %v2044, 7
        %v2046 = vsub.s32 %v2043, %v2045
        %v2047 = vrot.slane %v2037, %v2046
        %v2049 = vunpack.c.l.s4 1966171168
        %v2050 = vunpack.c.0.s8 %v2049
        %v2051 = vlaneseq
        %v2052 = vshrl.u32 %v2051, 7
        %v2053 = vsub.s32 %v2050, %v2052
        %v2054 = vrot.slane %v2038, %v2053
        %v2056 = vunpack.c.l.s4 1966171168
        %v2057 = vunpack.c.0.s8 %v2056
        %v2058 = vlaneseq
        %v2059 = vshrl.u32 %v2058, 7
        %v2060 = vsub.s32 %v2057, %v2059
        %v2061 = vrot.slane %v2039, %v2060
        %v2063 = vunpack.c.l.s4 1966171168
        %v2064 = vunpack.c.0.s8 %v2063
        %v2065 = vlaneseq
        %v2066 = vshrl.u32 %v2065, 7
        %v2067 = vsub.s32 %v2064, %v2066
        %v2068 = vrot.slane %v2040, %v2067
        %v2069 = vcombine.low %v2047, %v2054
        %v2070 = vcombine.low %v2061, %v2068
        %v2072 = vunpack.c.l.s4 1966171168
        %v2073 = vunpack.c.0.s8 %v2072
        %v2074 = vlaneseq
        %v2075 = vshrl.u32 %v2074, 7
        %v2076 = vsub.s32 %v2073, %v2075
        %v2077 = vrot.slane %v2069, %v2076
        %v2079 = vunpack.c.l.s4 1966171168
        %v2080 = vunpack.c.0.s8 %v2079
        %v2081 = vlaneseq
        %v2082 = vshrl.u32 %v2081, 7
        %v2083 = vsub.s32 %v2080, %v2082
        %v2084 = vrot.slane %v2070, %v2083
        %v2085 = vcombine.low %v2077, %v2084
        %v2086 = vcombine.low %v946, %v950
        %v2087 = vcombine.low %v954, %v958
        %v2088 = vcombine.low %v962, %v966
        %v2089 = vcombine.low %v970, %v974
        %v2091 = vunpack.c.l.s4 1966171168
        %v2092 = vunpack.c.0.s8 %v2091
        %v2093 = vlaneseq
        %v2094 = vshrl.u32 %v2093, 7
        %v2095 = vsub.s32 %v2092, %v2094
        %v2096 = vrot.slane %v2086, %v2095
        %v2098 = vunpack.c.l.s4 1966171168
        %v2099 = vunpack.c.0.s8 %v2098
        %v2100 = vlaneseq
        %v2101 = vshrl.u32 %v2100, 7
        %v2102 = vsub.s32 %v2099, %v2101
        %v2103 = vrot.slane %v2087, %v2102
        %v2105 = vunpack.c.l.s4 1966171168
        %v2106 = vunpack.c.0.s8 %v2105
        %v2107 = vlaneseq
        %v2108 = vshrl.u32 %v2107, 7
        %v2109 = vsub.s32 %v2106, %v2108
        %v2110 = vrot.slane %v2088, %v2109
        %v2112 = vunpack.c.l.s4 1966171168
        %v2113 = vunpack.c.0.s8 %v2112
        %v2114 = vlaneseq
        %v2115 = vshrl.u32 %v2114, 7
        %v2116 = vsub.s32 %v2113, %v2115
        %v2117 = vrot.slane %v2089, %v2116
        %v2118 = vcombine.low %v2096, %v2103
        %v2119 = vcombine.low %v2110, %v2117
        %v2121 = vunpack.c.l.s4 1966171168
        %v2122 = vunpack.c.0.s8 %v2121
        %v2123 = vlaneseq
        %v2124 = vshrl.u32 %v2123, 7
        %v2125 = vsub.s32 %v2122, %v2124
        %v2126 = vrot.slane %v2118, %v2125
        %v2128 = vunpack.c.l.s4 1966171168
        %v2129 = vunpack.c.0.s8 %v2128
        %v2130 = vlaneseq
        %v2131 = vshrl.u32 %v2130, 7
        %v2132 = vsub.s32 %v2129, %v2131
        %v2133 = vrot.slane %v2119, %v2132
        %v2134 = vcombine.low %v2126, %v2133
        %v2135 = vcombine.low %v978, %v982
        %v2136 = vcombine.low %v986, %v990
        %v2137 = vcombine.low %v994, %v998
        %v2138 = vcombine.low %v1002, %v1006
        %v2140 = vunpack.c.l.s4 1966171168
        %v2141 = vunpack.c.0.s8 %v2140
        %v2142 = vlaneseq
        %v2143 = vshrl.u32 %v2142, 7
        %v2144 = vsub.s32 %v2141, %v2143
        %v2145 = vrot.slane %v2135, %v2144
        %v2147 = vunpack.c.l.s4 1966171168
        %v2148 = vunpack.c.0.s8 %v2147
        %v2149 = vlaneseq
        %v2150 = vshrl.u32 %v2149, 7
        %v2151 = vsub.s32 %v2148, %v2150
        %v2152 = vrot.slane %v2136, %v2151
        %v2154 = vunpack.c.l.s4 1966171168
        %v2155 = vunpack.c.0.s8 %v2154
        %v2156 = vlaneseq
        %v2157 = vshrl.u32 %v2156, 7
        %v2158 = vsub.s32 %v2155, %v2157
        %v2159 = vrot.slane %v2137, %v2158
        %v2161 = vunpack.c.l.s4 1966171168
        %v2162 = vunpack.c.0.s8 %v2161
        %v2163 = vlaneseq
        %v2164 = vshrl.u32 %v2163, 7
        %v2165 = vsub.s32 %v2162, %v2164
        %v2166 = vrot.slane %v2138, %v2165
        %v2167 = vcombine.low %v2145, %v2152
        %v2168 = vcombine.low %v2159, %v2166
        %v2170 = vunpack.c.l.s4 1966171168
        %v2171 = vunpack.c.0.s8 %v2170
        %v2172 = vlaneseq
        %v2173 = vshrl.u32 %v2172, 7
        %v2174 = vsub.s32 %v2171, %v2173
        %v2175 = vrot.slane %v2167, %v2174
        %v2177 = vunpack.c.l.s4 1966171168
        %v2178 = vunpack.c.0.s8 %v2177
        %v2179 = vlaneseq
        %v2180 = vshrl.u32 %v2179, 7
        %v2181 = vsub.s32 %v2178, %v2180
        %v2182 = vrot.slane %v2168, %v2181
        %v2183 = vcombine.low %v2175, %v2182
        %v2184 = vcombine.low %v1010, %v1014
        %v2185 = vcombine.low %v1018, %v1022
        %v2186 = vcombine.low %v1026, %v1030
        %v2187 = vcombine.low %v1034, %v1038
        %v2189 = vunpack.c.l.s4 1966171168
        %v2190 = vunpack.c.0.s8 %v2189
        %v2191 = vlaneseq
        %v2192 = vshrl.u32 %v2191, 7
        %v2193 = vsub.s32 %v2190, %v2192
        %v2194 = vrot.slane %v2184, %v2193
        %v2196 = vunpack.c.l.s4 1966171168
        %v2197 = vunpack.c.0.s8 %v2196
        %v2198 = vlaneseq
        %v2199 = vshrl.u32 %v2198, 7
        %v2200 = vsub.s32 %v2197, %v2199
        %v2201 = vrot.slane %v2185, %v2200
        %v2203 = vunpack.c.l.s4 1966171168
        %v2204 = vunpack.c.0.s8 %v2203
        %v2205 = vlaneseq
        %v2206 = vshrl.u32 %v2205, 7
        %v2207 = vsub.s32 %v2204, %v2206
        %v2208 = vrot.slane %v2186, %v2207
        %v2210 = vunpack.c.l.s4 1966171168
        %v2211 = vunpack.c.0.s8 %v2210
        %v2212 = vlaneseq
        %v2213 = vshrl.u32 %v2212, 7
        %v2214 = vsub.s32 %v2211, %v2213
        %v2215 = vrot.slane %v2187, %v2214
        %v2216 = vcombine.low %v2194, %v2201
        %v2217 = vcombine.low %v2208, %v2215
        %v2219 = vunpack.c.l.s4 1966171168
        %v2220 = vunpack.c.0.s8 %v2219
        %v2221 = vlaneseq
        %v2222 = vshrl.u32 %v2221, 7
        %v2223 = vsub.s32 %v2220, %v2222
        %v2224 = vrot.slane %v2216, %v2223
        %v2226 = vunpack.c.l.s4 1966171168
        %v2227 = vunpack.c.0.s8 %v2226
        %v2228 = vlaneseq
        %v2229 = vshrl.u32 %v2228, 7
        %v2230 = vsub.s32 %v2227, %v2229
        %v2231 = vrot.slane %v2217, %v2230
        %v2232 = vcombine.low %v2224, %v2231
        %v2233 = vcombine.low %v1042, %v1046
        %v2234 = vcombine.low %v1050, %v1054
        %v2235 = vcombine.low %v1058, %v1062
        %v2236 = vcombine.low %v1066, %v1070
        %v2238 = vunpack.c.l.s4 1966171168
        %v2239 = vunpack.c.0.s8 %v2238
        %v2240 = vlaneseq
        %v2241 = vshrl.u32 %v2240, 7
        %v2242 = vsub.s32 %v2239, %v2241
        %v2243 = vrot.slane %v2233, %v2242
        %v2245 = vunpack.c.l.s4 1966171168
        %v2246 = vunpack.c.0.s8 %v2245
        %v2247 = vlaneseq
        %v2248 = vshrl.u32 %v2247, 7
        %v2249 = vsub.s32 %v2246, %v2248
        %v2250 = vrot.slane %v2234, %v2249
        %v2252 = vunpack.c.l.s4 1966171168
        %v2253 = vunpack.c.0.s8 %v2252
        %v2254 = vlaneseq
        %v2255 = vshrl.u32 %v2254, 7
        %v2256 = vsub.s32 %v2253, %v2255
        %v2257 = vrot.slane %v2235, %v2256
        %v2259 = vunpack.c.l.s4 1966171168
        %v2260 = vunpack.c.0.s8 %v2259
        %v2261 = vlaneseq
        %v2262 = vshrl.u32 %v2261, 7
        %v2263 = vsub.s32 %v2260, %v2262
        %v2264 = vrot.slane %v2236, %v2263
        %v2265 = vcombine.low %v2243, %v2250
        %v2266 = vcombine.low %v2257, %v2264
        %v2268 = vunpack.c.l.s4 1966171168
        %v2269 = vunpack.c.0.s8 %v2268
        %v2270 = vlaneseq
        %v2271 = vshrl.u32 %v2270, 7
        %v2272 = vsub.s32 %v2269, %v2271
        %v2273 = vrot.slane %v2265, %v2272
        %v2275 = vunpack.c.l.s4 1966171168
        %v2276 = vunpack.c.0.s8 %v2275
        %v2277 = vlaneseq
        %v2278 = vshrl.u32 %v2277, 7
        %v2279 = vsub.s32 %v2276, %v2278
        %v2280 = vrot.slane %v2266, %v2279
        %v2281 = vcombine.low %v2273, %v2280
        %v2282 = vcombine.low %v1074, %v1078
        %v2283 = vcombine.low %v1082, %v1086
        %v2284 = vcombine.low %v1090, %v1094
        %v2285 = vcombine.low %v1098, %v1102
        %v2287 = vunpack.c.l.s4 1966171168
        %v2288 = vunpack.c.0.s8 %v2287
        %v2289 = vlaneseq
        %v2290 = vshrl.u32 %v2289, 7
        %v2291 = vsub.s32 %v2288, %v2290
        %v2292 = vrot.slane %v2282, %v2291
        %v2294 = vunpack.c.l.s4 1966171168
        %v2295 = vunpack.c.0.s8 %v2294
        %v2296 = vlaneseq
        %v2297 = vshrl.u32 %v2296, 7
        %v2298 = vsub.s32 %v2295, %v2297
        %v2299 = vrot.slane %v2283, %v2298
        %v2301 = vunpack.c.l.s4 1966171168
        %v2302 = vunpack.c.0.s8 %v2301
        %v2303 = vlaneseq
        %v2304 = vshrl.u32 %v2303, 7
        %v2305 = vsub.s32 %v2302, %v2304
        %v2306 = vrot.slane %v2284, %v2305
        %v2308 = vunpack.c.l.s4 1966171168
        %v2309 = vunpack.c.0.s8 %v2308
        %v2310 = vlaneseq
        %v2311 = vshrl.u32 %v2310, 7
        %v2312 = vsub.s32 %v2309, %v2311
        %v2313 = vrot.slane %v2285, %v2312
        %v2314 = vcombine.low %v2292, %v2299
        %v2315 = vcombine.low %v2306, %v2313
        %v2317 = vunpack.c.l.s4 1966171168
        %v2318 = vunpack.c.0.s8 %v2317
        %v2319 = vlaneseq
        %v2320 = vshrl.u32 %v2319, 7
        %v2321 = vsub.s32 %v2318, %v2320
        %v2322 = vrot.slane %v2314, %v2321
        %v2324 = vunpack.c.l.s4 1966171168
        %v2325 = vunpack.c.0.s8 %v2324
        %v2326 = vlaneseq
        %v2327 = vshrl.u32 %v2326, 7
        %v2328 = vsub.s32 %v2325, %v2327
        %v2329 = vrot.slane %v2315, %v2328
        %v2330 = vcombine.low %v2322, %v2329
        %v2331 = vcombine.low %v1106, %v1110
        %v2332 = vcombine.low %v1114, %v1118
        %v2333 = vcombine.low %v1122, %v1126
        %v2334 = vcombine.low %v1130, %v1134
        %v2336 = vunpack.c.l.s4 1966171168
        %v2337 = vunpack.c.0.s8 %v2336
        %v2338 = vlaneseq
        %v2339 = vshrl.u32 %v2338, 7
        %v2340 = vsub.s32 %v2337, %v2339
        %v2341 = vrot.slane %v2331, %v2340
        %v2343 = vunpack.c.l.s4 1966171168
        %v2344 = vunpack.c.0.s8 %v2343
        %v2345 = vlaneseq
        %v2346 = vshrl.u32 %v2345, 7
        %v2347 = vsub.s32 %v2344, %v2346
        %v2348 = vrot.slane %v2332, %v2347
        %v2350 = vunpack.c.l.s4 1966171168
        %v2351 = vunpack.c.0.s8 %v2350
        %v2352 = vlaneseq
        %v2353 = vshrl.u32 %v2352, 7
        %v2354 = vsub.s32 %v2351, %v2353
        %v2355 = vrot.slane %v2333, %v2354
        %v2357 = vunpack.c.l.s4 1966171168
        %v2358 = vunpack.c.0.s8 %v2357
        %v2359 = vlaneseq
        %v2360 = vshrl.u32 %v2359, 7
        %v2361 = vsub.s32 %v2358, %v2360
        %v2362 = vrot.slane %v2334, %v2361
        %v2363 = vcombine.low %v2341, %v2348
        %v2364 = vcombine.low %v2355, %v2362
        %v2366 = vunpack.c.l.s4 1966171168
        %v2367 = vunpack.c.0.s8 %v2366
        %v2368 = vlaneseq
        %v2369 = vshrl.u32 %v2368, 7
        %v2370 = vsub.s32 %v2367, %v2369
        %v2371 = vrot.slane %v2363, %v2370
        %v2373 = vunpack.c.l.s4 1966171168
        %v2374 = vunpack.c.0.s8 %v2373
        %v2375 = vlaneseq
        %v2376 = vshrl.u32 %v2375, 7
        %v2377 = vsub.s32 %v2374, %v2376
        %v2378 = vrot.slane %v2364, %v2377
        %v2379 = vcombine.low %v2371, %v2378
        %v2380 = vcombine.low %v1138, %v1142
        %v2381 = vcombine.low %v1146, %v1150
        %v2382 = vcombine.low %v1154, %v1158
        %v2383 = vcombine.low %v1162, %v1166
        %v2385 = vunpack.c.l.s4 1966171168
        %v2386 = vunpack.c.0.s8 %v2385
        %v2387 = vlaneseq
        %v2388 = vshrl.u32 %v2387, 7
        %v2389 = vsub.s32 %v2386, %v2388
        %v2390 = vrot.slane %v2380, %v2389
        %v2392 = vunpack.c.l.s4 1966171168
        %v2393 = vunpack.c.0.s8 %v2392
        %v2394 = vlaneseq
        %v2395 = vshrl.u32 %v2394, 7
        %v2396 = vsub.s32 %v2393, %v2395
        %v2397 = vrot.slane %v2381, %v2396
        %v2399 = vunpack.c.l.s4 1966171168
        %v2400 = vunpack.c.0.s8 %v2399
        %v2401 = vlaneseq
        %v2402 = vshrl.u32 %v2401, 7
        %v2403 = vsub.s32 %v2400, %v2402
        %v2404 = vrot.slane %v2382, %v2403
        %v2406 = vunpack.c.l.s4 1966171168
        %v2407 = vunpack.c.0.s8 %v2406
        %v2408 = vlaneseq
        %v2409 = vshrl.u32 %v2408, 7
        %v2410 = vsub.s32 %v2407, %v2409
        %v2411 = vrot.slane %v2383, %v2410
        %v2412 = vcombine.low %v2390, %v2397
        %v2413 = vcombine.low %v2404, %v2411
        %v2415 = vunpack.c.l.s4 1966171168
        %v2416 = vunpack.c.0.s8 %v2415
        %v2417 = vlaneseq
        %v2418 = vshrl.u32 %v2417, 7
        %v2419 = vsub.s32 %v2416, %v2418
        %v2420 = vrot.slane %v2412, %v2419
        %v2422 = vunpack.c.l.s4 1966171168
        %v2423 = vunpack.c.0.s8 %v2422
        %v2424 = vlaneseq
        %v2425 = vshrl.u32 %v2424, 7
        %v2426 = vsub.s32 %v2423, %v2425
        %v2427 = vrot.slane %v2413, %v2426
        %v2428 = vcombine.low %v2420, %v2427
        %v2429 = vcombine.low %v1170, %v1174
        %v2430 = vcombine.low %v1178, %v1182
        %v2431 = vcombine.low %v1186, %v1190
        %v2432 = vcombine.low %v1194, %v1198
        %v2434 = vunpack.c.l.s4 1966171168
        %v2435 = vunpack.c.0.s8 %v2434
        %v2436 = vlaneseq
        %v2437 = vshrl.u32 %v2436, 7
        %v2438 = vsub.s32 %v2435, %v2437
        %v2439 = vrot.slane %v2429, %v2438
        %v2441 = vunpack.c.l.s4 1966171168
        %v2442 = vunpack.c.0.s8 %v2441
        %v2443 = vlaneseq
        %v2444 = vshrl.u32 %v2443, 7
        %v2445 = vsub.s32 %v2442, %v2444
        %v2446 = vrot.slane %v2430, %v2445
        %v2448 = vunpack.c.l.s4 1966171168
        %v2449 = vunpack.c.0.s8 %v2448
        %v2450 = vlaneseq
        %v2451 = vshrl.u32 %v2450, 7
        %v2452 = vsub.s32 %v2449, %v2451
        %v2453 = vrot.slane %v2431, %v2452
        %v2455 = vunpack.c.l.s4 1966171168
        %v2456 = vunpack.c.0.s8 %v2455
        %v2457 = vlaneseq
        %v2458 = vshrl.u32 %v2457, 7
        %v2459 = vsub.s32 %v2456, %v2458
        %v2460 = vrot.slane %v2432, %v2459
        %v2461 = vcombine.low %v2439, %v2446
        %v2462 = vcombine.low %v2453, %v2460
        %v2464 = vunpack.c.l.s4 1966171168
        %v2465 = vunpack.c.0.s8 %v2464
        %v2466 = vlaneseq
        %v2467 = vshrl.u32 %v2466, 7
        %v2468 = vsub.s32 %v2465, %v2467
        %v2469 = vrot.slane %v2461, %v2468
        %v2471 = vunpack.c.l.s4 1966171168
        %v2472 = vunpack.c.0.s8 %v2471
        %v2473 = vlaneseq
        %v2474 = vshrl.u32 %v2473, 7
        %v2475 = vsub.s32 %v2472, %v2474
        %v2476 = vrot.slane %v2462, %v2475
        %v2477 = vcombine.low %v2469, %v2476
        %v2478 = vcombine.low %v1202, %v1206
        %v2479 = vcombine.low %v1210, %v1214
        %v2480 = vcombine.low %v1218, %v1222
        %v2481 = vcombine.low %v1226, %v1230
        %v2483 = vunpack.c.l.s4 1966171168
        %v2484 = vunpack.c.0.s8 %v2483
        %v2485 = vlaneseq
        %v2486 = vshrl.u32 %v2485, 7
        %v2487 = vsub.s32 %v2484, %v2486
        %v2488 = vrot.slane %v2478, %v2487
        %v2490 = vunpack.c.l.s4 1966171168
        %v2491 = vunpack.c.0.s8 %v2490
        %v2492 = vlaneseq
        %v2493 = vshrl.u32 %v2492, 7
        %v2494 = vsub.s32 %v2491, %v2493
        %v2495 = vrot.slane %v2479, %v2494
        %v2497 = vunpack.c.l.s4 1966171168
        %v2498 = vunpack.c.0.s8 %v2497
        %v2499 = vlaneseq
        %v2500 = vshrl.u32 %v2499, 7
        %v2501 = vsub.s32 %v2498, %v2500
        %v2502 = vrot.slane %v2480, %v2501
        %v2504 = vunpack.c.l.s4 1966171168
        %v2505 = vunpack.c.0.s8 %v2504
        %v2506 = vlaneseq
        %v2507 = vshrl.u32 %v2506, 7
        %v2508 = vsub.s32 %v2505, %v2507
        %v2509 = vrot.slane %v2481, %v2508
        %v2510 = vcombine.low %v2488, %v2495
        %v2511 = vcombine.low %v2502, %v2509
        %v2513 = vunpack.c.l.s4 1966171168
        %v2514 = vunpack.c.0.s8 %v2513
        %v2515 = vlaneseq
        %v2516 = vshrl.u32 %v2515, 7
        %v2517 = vsub.s32 %v2514, %v2516
        %v2518 = vrot.slane %v2510, %v2517
        %v2520 = vunpack.c.l.s4 1966171168
        %v2521 = vunpack.c.0.s8 %v2520
        %v2522 = vlaneseq
        %v2523 = vshrl.u32 %v2522, 7
        %v2524 = vsub.s32 %v2521, %v2523
        %v2525 = vrot.slane %v2511, %v2524
        %v2526 = vcombine.low %v2518, %v2525
        %v2527 = vcombine.low %v1234, %v1238
        %v2528 = vcombine.low %v1242, %v1246
        %v2529 = vcombine.low %v1250, %v1254
        %v2530 = vcombine.low %v1258, %v1262
        %v2532 = vunpack.c.l.s4 1966171168
        %v2533 = vunpack.c.0.s8 %v2532
        %v2534 = vlaneseq
        %v2535 = vshrl.u32 %v2534, 7
        %v2536 = vsub.s32 %v2533, %v2535
        %v2537 = vrot.slane %v2527, %v2536
        %v2539 = vunpack.c.l.s4 1966171168
        %v2540 = vunpack.c.0.s8 %v2539
        %v2541 = vlaneseq
        %v2542 = vshrl.u32 %v2541, 7
        %v2543 = vsub.s32 %v2540, %v2542
        %v2544 = vrot.slane %v2528, %v2543
        %v2546 = vunpack.c.l.s4 1966171168
        %v2547 = vunpack.c.0.s8 %v2546
        %v2548 = vlaneseq
        %v2549 = vshrl.u32 %v2548, 7
        %v2550 = vsub.s32 %v2547, %v2549
        %v2551 = vrot.slane %v2529, %v2550
        %v2553 = vunpack.c.l.s4 1966171168
        %v2554 = vunpack.c.0.s8 %v2553
        %v2555 = vlaneseq
        %v2556 = vshrl.u32 %v2555, 7
        %v2557 = vsub.s32 %v2554, %v2556
        %v2558 = vrot.slane %v2530, %v2557
        %v2559 = vcombine.low %v2537, %v2544
        %v2560 = vcombine.low %v2551, %v2558
        %v2562 = vunpack.c.l.s4 1966171168
        %v2563 = vunpack.c.0.s8 %v2562
        %v2564 = vlaneseq
        %v2565 = vshrl.u32 %v2564, 7
        %v2566 = vsub.s32 %v2563, %v2565
        %v2567 = vrot.slane %v2559, %v2566
        %v2569 = vunpack.c.l.s4 1966171168
        %v2570 = vunpack.c.0.s8 %v2569
        %v2571 = vlaneseq
        %v2572 = vshrl.u32 %v2571, 7
        %v2573 = vsub.s32 %v2570, %v2572
        %v2574 = vrot.slane %v2560, %v2573
        %v2575 = vcombine.low %v2567, %v2574
        %v2576 = vcombine.low %v1266, %v1270
        %v2577 = vcombine.low %v1274, %v1278
        %v2578 = vcombine.low %v1282, %v1286
        %v2579 = vcombine.low %v1290, %v1294
        %v2581 = vunpack.c.l.s4 1966171168
        %v2582 = vunpack.c.0.s8 %v2581
        %v2583 = vlaneseq
        %v2584 = vshrl.u32 %v2583, 7
        %v2585 = vsub.s32 %v2582, %v2584
        %v2586 = vrot.slane %v2576, %v2585
        %v2588 = vunpack.c.l.s4 1966171168
        %v2589 = vunpack.c.0.s8 %v2588
        %v2590 = vlaneseq
        %v2591 = vshrl.u32 %v2590, 7
        %v2592 = vsub.s32 %v2589, %v2591
        %v2593 = vrot.slane %v2577, %v2592
        %v2595 = vunpack.c.l.s4 1966171168
        %v2596 = vunpack.c.0.s8 %v2595
        %v2597 = vlaneseq
        %v2598 = vshrl.u32 %v2597, 7
        %v2599 = vsub.s32 %v2596, %v2598
        %v2600 = vrot.slane %v2578, %v2599
        %v2602 = vunpack.c.l.s4 1966171168
        %v2603 = vunpack.c.0.s8 %v2602
        %v2604 = vlaneseq
        %v2605 = vshrl.u32 %v2604, 7
        %v2606 = vsub.s32 %v2603, %v2605
        %v2607 = vrot.slane %v2579, %v2606
        %v2608 = vcombine.low %v2586, %v2593
        %v2609 = vcombine.low %v2600, %v2607
        %v2611 = vunpack.c.l.s4 1966171168
        %v2612 = vunpack.c.0.s8 %v2611
        %v2613 = vlaneseq
        %v2614 = vshrl.u32 %v2613, 7
        %v2615 = vsub.s32 %v2612, %v2614
        %v2616 = vrot.slane %v2608, %v2615
        %v2618 = vunpack.c.l.s4 1966171168
        %v2619 = vunpack.c.0.s8 %v2618
        %v2620 = vlaneseq
        %v2621 = vshrl.u32 %v2620, 7
        %v2622 = vsub.s32 %v2619, %v2621
        %v2623 = vrot.slane %v2609, %v2622
        %v2624 = vcombine.low %v2616, %v2623
        %v2625 = vcombine.low %v1298, %v1302
        %v2626 = vcombine.low %v1306, %v1310
        %v2627 = vcombine.low %v1314, %v1318
        %v2628 = vcombine.low %v1322, %v1326
        %v2630 = vunpack.c.l.s4 1966171168
        %v2631 = vunpack.c.0.s8 %v2630
        %v2632 = vlaneseq
        %v2633 = vshrl.u32 %v2632, 7
        %v2634 = vsub.s32 %v2631, %v2633
        %v2635 = vrot.slane %v2625, %v2634
        %v2637 = vunpack.c.l.s4 1966171168
        %v2638 = vunpack.c.0.s8 %v2637
        %v2639 = vlaneseq
        %v2640 = vshrl.u32 %v2639, 7
        %v2641 = vsub.s32 %v2638, %v2640
        %v2642 = vrot.slane %v2626, %v2641
        %v2644 = vunpack.c.l.s4 1966171168
        %v2645 = vunpack.c.0.s8 %v2644
        %v2646 = vlaneseq
        %v2647 = vshrl.u32 %v2646, 7
        %v2648 = vsub.s32 %v2645, %v2647
        %v2649 = vrot.slane %v2627, %v2648
        %v2651 = vunpack.c.l.s4 1966171168
        %v2652 = vunpack.c.0.s8 %v2651
        %v2653 = vlaneseq
        %v2654 = vshrl.u32 %v2653, 7
        %v2655 = vsub.s32 %v2652, %v2654
        %v2656 = vrot.slane %v2628, %v2655
        %v2657 = vcombine.low %v2635, %v2642
        %v2658 = vcombine.low %v2649, %v2656
        %v2660 = vunpack.c.l.s4 1966171168
        %v2661 = vunpack.c.0.s8 %v2660
        %v2662 = vlaneseq
        %v2663 = vshrl.u32 %v2662, 7
        %v2664 = vsub.s32 %v2661, %v2663
        %v2665 = vrot.slane %v2657, %v2664
        %v2667 = vunpack.c.l.s4 1966171168
        %v2668 = vunpack.c.0.s8 %v2667
        %v2669 = vlaneseq
        %v2670 = vshrl.u32 %v2669, 7
        %v2671 = vsub.s32 %v2668, %v2670
        %v2672 = vrot.slane %v2658, %v2671
        %v2673 = vcombine.low %v2665, %v2672
        %v2674 = vcombine.low %v1330, %v1334
        %v2675 = vcombine.low %v1338, %v1342
        %v2676 = vcombine.low %v1346, %v1350
        %v2677 = vcombine.low %v1354, %v1358
        %v2679 = vunpack.c.l.s4 1966171168
        %v2680 = vunpack.c.0.s8 %v2679
        %v2681 = vlaneseq
        %v2682 = vshrl.u32 %v2681, 7
        %v2683 = vsub.s32 %v2680, %v2682
        %v2684 = vrot.slane %v2674, %v2683
        %v2686 = vunpack.c.l.s4 1966171168
        %v2687 = vunpack.c.0.s8 %v2686
        %v2688 = vlaneseq
        %v2689 = vshrl.u32 %v2688, 7
        %v2690 = vsub.s32 %v2687, %v2689
        %v2691 = vrot.slane %v2675, %v2690
        %v2693 = vunpack.c.l.s4 1966171168
        %v2694 = vunpack.c.0.s8 %v2693
        %v2695 = vlaneseq
        %v2696 = vshrl.u32 %v2695, 7
        %v2697 = vsub.s32 %v2694, %v2696
        %v2698 = vrot.slane %v2676, %v2697
        %v2700 = vunpack.c.l.s4 1966171168
        %v2701 = vunpack.c.0.s8 %v2700
        %v2702 = vlaneseq
        %v2703 = vshrl.u32 %v2702, 7
        %v2704 = vsub.s32 %v2701, %v2703
        %v2705 = vrot.slane %v2677, %v2704
        %v2706 = vcombine.low %v2684, %v2691
        %v2707 = vcombine.low %v2698, %v2705
        %v2709 = vunpack.c.l.s4 1966171168
        %v2710 = vunpack.c.0.s8 %v2709
        %v2711 = vlaneseq
        %v2712 = vshrl.u32 %v2711, 7
        %v2713 = vsub.s32 %v2710, %v2712
        %v2714 = vrot.slane %v2706, %v2713
        %v2716 = vunpack.c.l.s4 1966171168
        %v2717 = vunpack.c.0.s8 %v2716
        %v2718 = vlaneseq
        %v2719 = vshrl.u32 %v2718, 7
        %v2720 = vsub.s32 %v2717, %v2719
        %v2721 = vrot.slane %v2707, %v2720
        %v2722 = vcombine.low %v2714, %v2721
        %v2723 = vcombine.low %v1362, %v1366
        %v2724 = vcombine.low %v1370, %v1374
        %v2725 = vcombine.low %v1378, %v1382
        %v2726 = vcombine.low %v1386, %v1390
        %v2728 = vunpack.c.l.s4 1966171168
        %v2729 = vunpack.c.0.s8 %v2728
        %v2730 = vlaneseq
        %v2731 = vshrl.u32 %v2730, 7
        %v2732 = vsub.s32 %v2729, %v2731
        %v2733 = vrot.slane %v2723, %v2732
        %v2735 = vunpack.c.l.s4 1966171168
        %v2736 = vunpack.c.0.s8 %v2735
        %v2737 = vlaneseq
        %v2738 = vshrl.u32 %v2737, 7
        %v2739 = vsub.s32 %v2736, %v2738
        %v2740 = vrot.slane %v2724, %v2739
        %v2742 = vunpack.c.l.s4 1966171168
        %v2743 = vunpack.c.0.s8 %v2742
        %v2744 = vlaneseq
        %v2745 = vshrl.u32 %v2744, 7
        %v2746 = vsub.s32 %v2743, %v2745
        %v2747 = vrot.slane %v2725, %v2746
        %v2749 = vunpack.c.l.s4 1966171168
        %v2750 = vunpack.c.0.s8 %v2749
        %v2751 = vlaneseq
        %v2752 = vshrl.u32 %v2751, 7
        %v2753 = vsub.s32 %v2750, %v2752
        %v2754 = vrot.slane %v2726, %v2753
        %v2755 = vcombine.low %v2733, %v2740
        %v2756 = vcombine.low %v2747, %v2754
        %v2758 = vunpack.c.l.s4 1966171168
        %v2759 = vunpack.c.0.s8 %v2758
        %v2760 = vlaneseq
        %v2761 = vshrl.u32 %v2760, 7
        %v2762 = vsub.s32 %v2759, %v2761
        %v2763 = vrot.slane %v2755, %v2762
        %v2765 = vunpack.c.l.s4 1966171168
        %v2766 = vunpack.c.0.s8 %v2765
        %v2767 = vlaneseq
        %v2768 = vshrl.u32 %v2767, 7
        %v2769 = vsub.s32 %v2766, %v2768
        %v2770 = vrot.slane %v2756, %v2769
        %v2771 = vcombine.low %v2763, %v2770
        %v2772 = vcombine.low %v1394, %v1398
        %v2773 = vcombine.low %v1402, %v1406
        %v2774 = vcombine.low %v1410, %v1414
        %v2775 = vcombine.low %v1418, %v1422
        %v2777 = vunpack.c.l.s4 1966171168
        %v2778 = vunpack.c.0.s8 %v2777
        %v2779 = vlaneseq
        %v2780 = vshrl.u32 %v2779, 7
        %v2781 = vsub.s32 %v2778, %v2780
        %v2782 = vrot.slane %v2772, %v2781
        %v2784 = vunpack.c.l.s4 1966171168
        %v2785 = vunpack.c.0.s8 %v2784
        %v2786 = vlaneseq
        %v2787 = vshrl.u32 %v2786, 7
        %v2788 = vsub.s32 %v2785, %v2787
        %v2789 = vrot.slane %v2773, %v2788
        %v2791 = vunpack.c.l.s4 1966171168
        %v2792 = vunpack.c.0.s8 %v2791
        %v2793 = vlaneseq
        %v2794 = vshrl.u32 %v2793, 7
        %v2795 = vsub.s32 %v2792, %v2794
        %v2796 = vrot.slane %v2774, %v2795
        %v2798 = vunpack.c.l.s4 1966171168
        %v2799 = vunpack.c.0.s8 %v2798
        %v2800 = vlaneseq
        %v2801 = vshrl.u32 %v2800, 7
        %v2802 = vsub.s32 %v2799, %v2801
        %v2803 = vrot.slane %v2775, %v2802
        %v2804 = vcombine.low %v2782, %v2789
        %v2805 = vcombine.low %v2796, %v2803
        %v2807 = vunpack.c.l.s4 1966171168
        %v2808 = vunpack.c.0.s8 %v2807
        %v2809 = vlaneseq
        %v2810 = vshrl.u32 %v2809, 7
        %v2811 = vsub.s32 %v2808, %v2810
        %v2812 = vrot.slane %v2804, %v2811
        %v2814 = vunpack.c.l.s4 1966171168
        %v2815 = vunpack.c.0.s8 %v2814
        %v2816 = vlaneseq
        %v2817 = vshrl.u32 %v2816, 7
        %v2818 = vsub.s32 %v2815, %v2817
        %v2819 = vrot.slane %v2805, %v2818
        %v2820 = vcombine.low %v2812, %v2819
        %v2821 = vcombine.low %v1426, %v1430
        %v2822 = vcombine.low %v1434, %v1438
        %v2823 = vcombine.low %v1442, %v1446
        %v2824 = vcombine.low %v1450, %v1454
        %v2826 = vunpack.c.l.s4 1966171168
        %v2827 = vunpack.c.0.s8 %v2826
        %v2828 = vlaneseq
        %v2829 = vshrl.u32 %v2828, 7
        %v2830 = vsub.s32 %v2827, %v2829
        %v2831 = vrot.slane %v2821, %v2830
        %v2833 = vunpack.c.l.s4 1966171168
        %v2834 = vunpack.c.0.s8 %v2833
        %v2835 = vlaneseq
        %v2836 = vshrl.u32 %v2835, 7
        %v2837 = vsub.s32 %v2834, %v2836
        %v2838 = vrot.slane %v2822, %v2837
        %v2840 = vunpack.c.l.s4 1966171168
        %v2841 = vunpack.c.0.s8 %v2840
        %v2842 = vlaneseq
        %v2843 = vshrl.u32 %v2842, 7
        %v2844 = vsub.s32 %v2841, %v2843
        %v2845 = vrot.slane %v2823, %v2844
        %v2847 = vunpack.c.l.s4 1966171168
        %v2848 = vunpack.c.0.s8 %v2847
        %v2849 = vlaneseq
        %v2850 = vshrl.u32 %v2849, 7
        %v2851 = vsub.s32 %v2848, %v2850
        %v2852 = vrot.slane %v2824, %v2851
        %v2853 = vcombine.low %v2831, %v2838
        %v2854 = vcombine.low %v2845, %v2852
        %v2856 = vunpack.c.l.s4 1966171168
        %v2857 = vunpack.c.0.s8 %v2856
        %v2858 = vlaneseq
        %v2859 = vshrl.u32 %v2858, 7
        %v2860 = vsub.s32 %v2857, %v2859
        %v2861 = vrot.slane %v2853, %v2860
        %v2863 = vunpack.c.l.s4 1966171168
        %v2864 = vunpack.c.0.s8 %v2863
        %v2865 = vlaneseq
        %v2866 = vshrl.u32 %v2865, 7
        %v2867 = vsub.s32 %v2864, %v2866
        %v2868 = vrot.slane %v2854, %v2867
        %v2869 = vcombine.low %v2861, %v2868
        %v2870 = vcombine.low %v1458, %v1462
        %v2871 = vcombine.low %v1466, %v1470
        %v2872 = vcombine.low %v1474, %v1478
        %v2873 = vcombine.low %v1482, %v1486
        %v2875 = vunpack.c.l.s4 1966171168
        %v2876 = vunpack.c.0.s8 %v2875
        %v2877 = vlaneseq
        %v2878 = vshrl.u32 %v2877, 7
        %v2879 = vsub.s32 %v2876, %v2878
        %v2880 = vrot.slane %v2870, %v2879
        %v2882 = vunpack.c.l.s4 1966171168
        %v2883 = vunpack.c.0.s8 %v2882
        %v2884 = vlaneseq
        %v2885 = vshrl.u32 %v2884, 7
        %v2886 = vsub.s32 %v2883, %v2885
        %v2887 = vrot.slane %v2871, %v2886
        %v2889 = vunpack.c.l.s4 1966171168
        %v2890 = vunpack.c.0.s8 %v2889
        %v2891 = vlaneseq
        %v2892 = vshrl.u32 %v2891, 7
        %v2893 = vsub.s32 %v2890, %v2892
        %v2894 = vrot.slane %v2872, %v2893
        %v2896 = vunpack.c.l.s4 1966171168
        %v2897 = vunpack.c.0.s8 %v2896
        %v2898 = vlaneseq
        %v2899 = vshrl.u32 %v2898, 7
        %v2900 = vsub.s32 %v2897, %v2899
        %v2901 = vrot.slane %v2873, %v2900
        %v2902 = vcombine.low %v2880, %v2887
        %v2903 = vcombine.low %v2894, %v2901
        %v2905 = vunpack.c.l.s4 1966171168
        %v2906 = vunpack.c.0.s8 %v2905
        %v2907 = vlaneseq
        %v2908 = vshrl.u32 %v2907, 7
        %v2909 = vsub.s32 %v2906, %v2908
        %v2910 = vrot.slane %v2902, %v2909
        %v2912 = vunpack.c.l.s4 1966171168
        %v2913 = vunpack.c.0.s8 %v2912
        %v2914 = vlaneseq
        %v2915 = vshrl.u32 %v2914, 7
        %v2916 = vsub.s32 %v2913, %v2915
        %v2917 = vrot.slane %v2903, %v2916
        %v2918 = vcombine.low %v2910, %v2917
        %v2919 = vcombine.low %v1490, %v1494
        %v2920 = vcombine.low %v1498, %v1502
        %v2921 = vcombine.low %v1506, %v1510
        %v2922 = vcombine.low %v1514, %v1518
        %v2924 = vunpack.c.l.s4 1966171168
        %v2925 = vunpack.c.0.s8 %v2924
        %v2926 = vlaneseq
        %v2927 = vshrl.u32 %v2926, 7
        %v2928 = vsub.s32 %v2925, %v2927
        %v2929 = vrot.slane %v2919, %v2928
        %v2931 = vunpack.c.l.s4 1966171168
        %v2932 = vunpack.c.0.s8 %v2931
        %v2933 = vlaneseq
        %v2934 = vshrl.u32 %v2933, 7
        %v2935 = vsub.s32 %v2932, %v2934
        %v2936 = vrot.slane %v2920, %v2935
        %v2938 = vunpack.c.l.s4 1966171168
        %v2939 = vunpack.c.0.s8 %v2938
        %v2940 = vlaneseq
        %v2941 = vshrl.u32 %v2940, 7
        %v2942 = vsub.s32 %v2939, %v2941
        %v2943 = vrot.slane %v2921, %v2942
        %v2945 = vunpack.c.l.s4 1966171168
        %v2946 = vunpack.c.0.s8 %v2945
        %v2947 = vlaneseq
        %v2948 = vshrl.u32 %v2947, 7
        %v2949 = vsub.s32 %v2946, %v2948
        %v2950 = vrot.slane %v2922, %v2949
        %v2951 = vcombine.low %v2929, %v2936
        %v2952 = vcombine.low %v2943, %v2950
        %v2954 = vunpack.c.l.s4 1966171168
        %v2955 = vunpack.c.0.s8 %v2954
        %v2956 = vlaneseq
        %v2957 = vshrl.u32 %v2956, 7
        %v2958 = vsub.s32 %v2955, %v2957
        %v2959 = vrot.slane %v2951, %v2958
        %v2961 = vunpack.c.l.s4 1966171168
        %v2962 = vunpack.c.0.s8 %v2961
        %v2963 = vlaneseq
        %v2964 = vshrl.u32 %v2963, 7
        %v2965 = vsub.s32 %v2962, %v2964
        %v2966 = vrot.slane %v2952, %v2965
        %v2967 = vcombine.low %v2959, %v2966
        %v2968 = vcombine.low %v1522, %v1526
        %v2969 = vcombine.low %v1530, %v1534
        %v2970 = vcombine.low %v1538, %v1542
        %v2971 = vcombine.low %v1546, %v1550
        %v2973 = vunpack.c.l.s4 1966171168
        %v2974 = vunpack.c.0.s8 %v2973
        %v2975 = vlaneseq
        %v2976 = vshrl.u32 %v2975, 7
        %v2977 = vsub.s32 %v2974, %v2976
        %v2978 = vrot.slane %v2968, %v2977
        %v2980 = vunpack.c.l.s4 1966171168
        %v2981 = vunpack.c.0.s8 %v2980
        %v2982 = vlaneseq
        %v2983 = vshrl.u32 %v2982, 7
        %v2984 = vsub.s32 %v2981, %v2983
        %v2985 = vrot.slane %v2969, %v2984
        %v2987 = vunpack.c.l.s4 1966171168
        %v2988 = vunpack.c.0.s8 %v2987
        %v2989 = vlaneseq
        %v2990 = vshrl.u32 %v2989, 7
        %v2991 = vsub.s32 %v2988, %v2990
        %v2992 = vrot.slane %v2970, %v2991
        %v2994 = vunpack.c.l.s4 1966171168
        %v2995 = vunpack.c.0.s8 %v2994
        %v2996 = vlaneseq
        %v2997 = vshrl.u32 %v2996, 7
        %v2998 = vsub.s32 %v2995, %v2997
        %v2999 = vrot.slane %v2971, %v2998
        %v3000 = vcombine.low %v2978, %v2985
        %v3001 = vcombine.low %v2992, %v2999
        %v3003 = vunpack.c.l.s4 1966171168
        %v3004 = vunpack.c.0.s8 %v3003
        %v3005 = vlaneseq
        %v3006 = vshrl.u32 %v3005, 7
        %v3007 = vsub.s32 %v3004, %v3006
        %v3008 = vrot.slane %v3000, %v3007
        %v3010 = vunpack.c.l.s4 1966171168
        %v3011 = vunpack.c.0.s8 %v3010
        %v3012 = vlaneseq
        %v3013 = vshrl.u32 %v3012, 7
        %v3014 = vsub.s32 %v3011, %v3013
        %v3015 = vrot.slane %v3001, %v3014
        %v3016 = vcombine.low %v3008, %v3015
        %v3017 = vcombine.low %v1554, %v1558
        %v3018 = vcombine.low %v1562, %v1566
        %v3019 = vcombine.low %v1570, %v1574
        %v3020 = vcombine.low %v1578, %v1582
        %v3022 = vunpack.c.l.s4 1966171168
        %v3023 = vunpack.c.0.s8 %v3022
        %v3024 = vlaneseq
        %v3025 = vshrl.u32 %v3024, 7
        %v3026 = vsub.s32 %v3023, %v3025
        %v3027 = vrot.slane %v3017, %v3026
        %v3029 = vunpack.c.l.s4 1966171168
        %v3030 = vunpack.c.0.s8 %v3029
        %v3031 = vlaneseq
        %v3032 = vshrl.u32 %v3031, 7
        %v3033 = vsub.s32 %v3030, %v3032
        %v3034 = vrot.slane %v3018, %v3033
        %v3036 = vunpack.c.l.s4 1966171168
        %v3037 = vunpack.c.0.s8 %v3036
        %v3038 = vlaneseq
        %v3039 = vshrl.u32 %v3038, 7
        %v3040 = vsub.s32 %v3037, %v3039
        %v3041 = vrot.slane %v3019, %v3040
        %v3043 = vunpack.c.l.s4 1966171168
        %v3044 = vunpack.c.0.s8 %v3043
        %v3045 = vlaneseq
        %v3046 = vshrl.u32 %v3045, 7
        %v3047 = vsub.s32 %v3044, %v3046
        %v3048 = vrot.slane %v3020, %v3047
        %v3049 = vcombine.low %v3027, %v3034
        %v3050 = vcombine.low %v3041, %v3048
        %v3052 = vunpack.c.l.s4 1966171168
        %v3053 = vunpack.c.0.s8 %v3052
        %v3054 = vlaneseq
        %v3055 = vshrl.u32 %v3054, 7
        %v3056 = vsub.s32 %v3053, %v3055
        %v3057 = vrot.slane %v3049, %v3056
        %v3059 = vunpack.c.l.s4 1966171168
        %v3060 = vunpack.c.0.s8 %v3059
        %v3061 = vlaneseq
        %v3062 = vshrl.u32 %v3061, 7
        %v3063 = vsub.s32 %v3060, %v3062
        %v3064 = vrot.slane %v3050, %v3063
        %v3065 = vcombine.low %v3057, %v3064
        %v3066 = vcombine.low %v1586, %v1590
        %v3067 = vcombine.low %v1594, %v1598
        %v3068 = vcombine.low %v1602, %v1606
        %v3069 = vcombine.low %v1610, %v1614
        %v3071 = vunpack.c.l.s4 1966171168
        %v3072 = vunpack.c.0.s8 %v3071
        %v3073 = vlaneseq
        %v3074 = vshrl.u32 %v3073, 7
        %v3075 = vsub.s32 %v3072, %v3074
        %v3076 = vrot.slane %v3066, %v3075
        %v3078 = vunpack.c.l.s4 1966171168
        %v3079 = vunpack.c.0.s8 %v3078
        %v3080 = vlaneseq
        %v3081 = vshrl.u32 %v3080, 7
        %v3082 = vsub.s32 %v3079, %v3081
        %v3083 = vrot.slane %v3067, %v3082
        %v3085 = vunpack.c.l.s4 1966171168
        %v3086 = vunpack.c.0.s8 %v3085
        %v3087 = vlaneseq
        %v3088 = vshrl.u32 %v3087, 7
        %v3089 = vsub.s32 %v3086, %v3088
        %v3090 = vrot.slane %v3068, %v3089
        %v3092 = vunpack.c.l.s4 1966171168
        %v3093 = vunpack.c.0.s8 %v3092
        %v3094 = vlaneseq
        %v3095 = vshrl.u32 %v3094, 7
        %v3096 = vsub.s32 %v3093, %v3095
        %v3097 = vrot.slane %v3069, %v3096
        %v3098 = vcombine.low %v3076, %v3083
        %v3099 = vcombine.low %v3090, %v3097
        %v3101 = vunpack.c.l.s4 1966171168
        %v3102 = vunpack.c.0.s8 %v3101
        %v3103 = vlaneseq
        %v3104 = vshrl.u32 %v3103, 7
        %v3105 = vsub.s32 %v3102, %v3104
        %v3106 = vrot.slane %v3098, %v3105
        %v3108 = vunpack.c.l.s4 1966171168
        %v3109 = vunpack.c.0.s8 %v3108
        %v3110 = vlaneseq
        %v3111 = vshrl.u32 %v3110, 7
        %v3112 = vsub.s32 %v3109, %v3111
        %v3113 = vrot.slane %v3099, %v3112
        %v3114 = vcombine.low %v3106, %v3113
        %v3115 = vcombine.low %v1618, %v1622
        %v3116 = vcombine.low %v1626, %v1630
        %v3117 = vcombine.low %v1634, %v1638
        %v3118 = vcombine.low %v1642, %v1646
        %v3120 = vunpack.c.l.s4 1966171168
        %v3121 = vunpack.c.0.s8 %v3120
        %v3122 = vlaneseq
        %v3123 = vshrl.u32 %v3122, 7
        %v3124 = vsub.s32 %v3121, %v3123
        %v3125 = vrot.slane %v3115, %v3124
        %v3127 = vunpack.c.l.s4 1966171168
        %v3128 = vunpack.c.0.s8 %v3127
        %v3129 = vlaneseq
        %v3130 = vshrl.u32 %v3129, 7
        %v3131 = vsub.s32 %v3128, %v3130
        %v3132 = vrot.slane %v3116, %v3131
        %v3134 = vunpack.c.l.s4 1966171168
        %v3135 = vunpack.c.0.s8 %v3134
        %v3136 = vlaneseq
        %v3137 = vshrl.u32 %v3136, 7
        %v3138 = vsub.s32 %v3135, %v3137
        %v3139 = vrot.slane %v3117, %v3138
        %v3141 = vunpack.c.l.s4 1966171168
        %v3142 = vunpack.c.0.s8 %v3141
        %v3143 = vlaneseq
        %v3144 = vshrl.u32 %v3143, 7
        %v3145 = vsub.s32 %v3142, %v3144
        %v3146 = vrot.slane %v3118, %v3145
        %v3147 = vcombine.low %v3125, %v3132
        %v3148 = vcombine.low %v3139, %v3146
        %v3150 = vunpack.c.l.s4 1966171168
        %v3151 = vunpack.c.0.s8 %v3150
        %v3152 = vlaneseq
        %v3153 = vshrl.u32 %v3152, 7
        %v3154 = vsub.s32 %v3151, %v3153
        %v3155 = vrot.slane %v3147, %v3154
        %v3157 = vunpack.c.l.s4 1966171168
        %v3158 = vunpack.c.0.s8 %v3157
        %v3159 = vlaneseq
        %v3160 = vshrl.u32 %v3159, 7
        %v3161 = vsub.s32 %v3158, %v3160
        %v3162 = vrot.slane %v3148, %v3161
        %v3163 = vcombine.low %v3155, %v3162
        %v3164 = vcombine.low %v1650, %v1654
        %v3165 = vcombine.low %v1658, %v1662
        %v3166 = vcombine.low %v1666, %v1670
        %v3167 = vcombine.low %v1674, %v1678
        %v3169 = vunpack.c.l.s4 1966171168
        %v3170 = vunpack.c.0.s8 %v3169
        %v3171 = vlaneseq
        %v3172 = vshrl.u32 %v3171, 7
        %v3173 = vsub.s32 %v3170, %v3172
        %v3174 = vrot.slane %v3164, %v3173
        %v3176 = vunpack.c.l.s4 1966171168
        %v3177 = vunpack.c.0.s8 %v3176
        %v3178 = vlaneseq
        %v3179 = vshrl.u32 %v3178, 7
        %v3180 = vsub.s32 %v3177, %v3179
        %v3181 = vrot.slane %v3165, %v3180
        %v3183 = vunpack.c.l.s4 1966171168
        %v3184 = vunpack.c.0.s8 %v3183
        %v3185 = vlaneseq
        %v3186 = vshrl.u32 %v3185, 7
        %v3187 = vsub.s32 %v3184, %v3186
        %v3188 = vrot.slane %v3166, %v3187
        %v3190 = vunpack.c.l.s4 1966171168
        %v3191 = vunpack.c.0.s8 %v3190
        %v3192 = vlaneseq
        %v3193 = vshrl.u32 %v3192, 7
        %v3194 = vsub.s32 %v3191, %v3193
        %v3195 = vrot.slane %v3167, %v3194
        %v3196 = vcombine.low %v3174, %v3181
        %v3197 = vcombine.low %v3188, %v3195
        %v3199 = vunpack.c.l.s4 1966171168
        %v3200 = vunpack.c.0.s8 %v3199
        %v3201 = vlaneseq
        %v3202 = vshrl.u32 %v3201, 7
        %v3203 = vsub.s32 %v3200, %v3202
        %v3204 = vrot.slane %v3196, %v3203
        %v3206 = vunpack.c.l.s4 1966171168
        %v3207 = vunpack.c.0.s8 %v3206
        %v3208 = vlaneseq
        %v3209 = vshrl.u32 %v3208, 7
        %v3210 = vsub.s32 %v3207, %v3209
        %v3211 = vrot.slane %v3197, %v3210
        %v3212 = vcombine.low %v3204, %v3211
        %v3213 = vcombine.low %v1682, %v1686
        %v3214 = vcombine.low %v1690, %v1694
        %v3215 = vcombine.low %v1698, %v1702
        %v3216 = vcombine.low %v1706, %v1710
        %v3218 = vunpack.c.l.s4 1966171168
        %v3219 = vunpack.c.0.s8 %v3218
        %v3220 = vlaneseq
        %v3221 = vshrl.u32 %v3220, 7
        %v3222 = vsub.s32 %v3219, %v3221
        %v3223 = vrot.slane %v3213, %v3222
        %v3225 = vunpack.c.l.s4 1966171168
        %v3226 = vunpack.c.0.s8 %v3225
        %v3227 = vlaneseq
        %v3228 = vshrl.u32 %v3227, 7
        %v3229 = vsub.s32 %v3226, %v3228
        %v3230 = vrot.slane %v3214, %v3229
        %v3232 = vunpack.c.l.s4 1966171168
        %v3233 = vunpack.c.0.s8 %v3232
        %v3234 = vlaneseq
        %v3235 = vshrl.u32 %v3234, 7
        %v3236 = vsub.s32 %v3233, %v3235
        %v3237 = vrot.slane %v3215, %v3236
        %v3239 = vunpack.c.l.s4 1966171168
        %v3240 = vunpack.c.0.s8 %v3239
        %v3241 = vlaneseq
        %v3242 = vshrl.u32 %v3241, 7
        %v3243 = vsub.s32 %v3240, %v3242
        %v3244 = vrot.slane %v3216, %v3243
        %v3245 = vcombine.low %v3223, %v3230
        %v3246 = vcombine.low %v3237, %v3244
        %v3248 = vunpack.c.l.s4 1966171168
        %v3249 = vunpack.c.0.s8 %v3248
        %v3250 = vlaneseq
        %v3251 = vshrl.u32 %v3250, 7
        %v3252 = vsub.s32 %v3249, %v3251
        %v3253 = vrot.slane %v3245, %v3252
        %v3255 = vunpack.c.l.s4 1966171168
        %v3256 = vunpack.c.0.s8 %v3255
        %v3257 = vlaneseq
        %v3258 = vshrl.u32 %v3257, 7
        %v3259 = vsub.s32 %v3256, %v3258
        %v3260 = vrot.slane %v3246, %v3259
        %v3261 = vcombine.low %v3253, %v3260
        %v3262 = vcombine.low %v1714, %v1718
        %v3263 = vcombine.low %v1722, %v1726
        %v3264 = vcombine.low %v1730, %v1734
        %v3265 = vcombine.low %v1738, %v1742
        %v3267 = vunpack.c.l.s4 1966171168
        %v3268 = vunpack.c.0.s8 %v3267
        %v3269 = vlaneseq
        %v3270 = vshrl.u32 %v3269, 7
        %v3271 = vsub.s32 %v3268, %v3270
        %v3272 = vrot.slane %v3262, %v3271
        %v3274 = vunpack.c.l.s4 1966171168
        %v3275 = vunpack.c.0.s8 %v3274
        %v3276 = vlaneseq
        %v3277 = vshrl.u32 %v3276, 7
        %v3278 = vsub.s32 %v3275, %v3277
        %v3279 = vrot.slane %v3263, %v3278
        %v3281 = vunpack.c.l.s4 1966171168
        %v3282 = vunpack.c.0.s8 %v3281
        %v3283 = vlaneseq
        %v3284 = vshrl.u32 %v3283, 7
        %v3285 = vsub.s32 %v3282, %v3284
        %v3286 = vrot.slane %v3264, %v3285
        %v3288 = vunpack.c.l.s4 1966171168
        %v3289 = vunpack.c.0.s8 %v3288
        %v3290 = vlaneseq
        %v3291 = vshrl.u32 %v3290, 7
        %v3292 = vsub.s32 %v3289, %v3291
        %v3293 = vrot.slane %v3265, %v3292
        %v3294 = vcombine.low %v3272, %v3279
        %v3295 = vcombine.low %v3286, %v3293
        %v3297 = vunpack.c.l.s4 1966171168
        %v3298 = vunpack.c.0.s8 %v3297
        %v3299 = vlaneseq
        %v3300 = vshrl.u32 %v3299, 7
        %v3301 = vsub.s32 %v3298, %v3300
        %v3302 = vrot.slane %v3294, %v3301
        %v3304 = vunpack.c.l.s4 1966171168
        %v3305 = vunpack.c.0.s8 %v3304
        %v3306 = vlaneseq
        %v3307 = vshrl.u32 %v3306, 7
        %v3308 = vsub.s32 %v3305, %v3307
        %v3309 = vrot.slane %v3295, %v3308
        %v3310 = vcombine.low %v3302, %v3309
        %3311 = vset.pattern.permute.xlu0 0
        %3312 = vperm.xlu0 %3311, %v1791
        %v3313 = vpop.permute.xlu0 %3312
        %3314 = vset.pattern.permute.xlu0 0
        %3315 = vperm.xlu0 %3314, %v1840
        %v3316 = vpop.permute.xlu0 %3315
        %3317 = vset.pattern.permute.xlu0 0
        %3318 = vperm.xlu0 %3317, %v1889
        %v3319 = vpop.permute.xlu0 %3318
        %3320 = vset.pattern.permute.xlu0 0
        %3321 = vperm.xlu0 %3320, %v1938
        %v3322 = vpop.permute.xlu0 %3321
        %3323 = vset.pattern.permute.xlu0 0
        %3324 = vperm.xlu0 %3323, %v1987
        %v3325 = vpop.permute.xlu0 %3324
        %3326 = vset.pattern.permute.xlu0 0
        %3327 = vperm.xlu0 %3326, %v2036
        %v3328 = vpop.permute.xlu0 %3327
        %3329 = vset.pattern.permute.xlu0 0
        %3330 = vperm.xlu0 %3329, %v2085
        %v3331 = vpop.permute.xlu0 %3330
        %3332 = vset.pattern.permute.xlu0 0
        %3333 = vperm.xlu0 %3332, %v2134
        %v3334 = vpop.permute.xlu0 %3333
        %3335 = vset.pattern.permute.xlu0 0
        %3336 = vperm.xlu0 %3335, %v2183
        %v3337 = vpop.permute.xlu0 %3336
        %3338 = vset.pattern.permute.xlu0 0
        %3339 = vperm.xlu0 %3338, %v2232
        %v3340 = vpop.permute.xlu0 %3339
        %3341 = vset.pattern.permute.xlu0 0
        %3342 = vperm.xlu0 %3341, %v2281
        %v3343 = vpop.permute.xlu0 %3342
        %3344 = vset.pattern.permute.xlu0 0
        %3345 = vperm.xlu0 %3344, %v2330
        %v3346 = vpop.permute.xlu0 %3345
        %3347 = vset.pattern.permute.xlu0 0
        %3348 = vperm.xlu0 %3347, %v2379
        %v3349 = vpop.permute.xlu0 %3348
        %3350 = vset.pattern.permute.xlu0 0
        %3351 = vperm.xlu0 %3350, %v2428
        %v3352 = vpop.permute.xlu0 %3351
        %3353 = vset.pattern.permute.xlu0 0
        %3354 = vperm.xlu0 %3353, %v2477
        %v3355 = vpop.permute.xlu0 %3354
        %3356 = vset.pattern.permute.xlu0 0
        %3357 = vperm.xlu0 %3356, %v2526
        %v3358 = vpop.permute.xlu0 %3357
        %3359 = vset.pattern.permute.xlu0 0
        %3360 = vperm.xlu0 %3359, %v2575
        %v3361 = vpop.permute.xlu0 %3360
        %3362 = vset.pattern.permute.xlu0 0
        %3363 = vperm.xlu0 %3362, %v2624
        %v3364 = vpop.permute.xlu0 %3363
        %3365 = vset.pattern.permute.xlu0 0
        %3366 = vperm.xlu0 %3365, %v2673
        %v3367 = vpop.permute.xlu0 %3366
        %3368 = vset.pattern.permute.xlu0 0
        %3369 = vperm.xlu0 %3368, %v2722
        %v3370 = vpop.permute.xlu0 %3369
        %3371 = vset.pattern.permute.xlu0 0
        %3372 = vperm.xlu0 %3371, %v2771
        %v3373 = vpop.permute.xlu0 %3372
        %3374 = vset.pattern.permute.xlu0 0
        %3375 = vperm.xlu0 %3374, %v2820
        %v3376 = vpop.permute.xlu0 %3375
        %3377 = vset.pattern.permute.xlu0 0
        %3378 = vperm.xlu0 %3377, %v2869
        %v3379 = vpop.permute.xlu0 %3378
        %3380 = vset.pattern.permute.xlu0 0
        %3381 = vperm.xlu0 %3380, %v2918
        %v3382 = vpop.permute.xlu0 %3381
        %3383 = vset.pattern.permute.xlu0 0
        %3384 = vperm.xlu0 %3383, %v2967
        %v3385 = vpop.permute.xlu0 %3384
        %3386 = vset.pattern.permute.xlu0 0
        %3387 = vperm.xlu0 %3386, %v3016
        %v3388 = vpop.permute.xlu0 %3387
        %3389 = vset.pattern.permute.xlu0 0
        %3390 = vperm.xlu0 %3389, %v3065
        %v3391 = vpop.permute.xlu0 %3390
        %3392 = vset.pattern.permute.xlu0 0
        %3393 = vperm.xlu0 %3392, %v3114
        %v3394 = vpop.permute.xlu0 %3393
        %3395 = vset.pattern.permute.xlu0 0
        %3396 = vperm.xlu0 %3395, %v3163
        %v3397 = vpop.permute.xlu0 %3396
        %3398 = vset.pattern.permute.xlu0 0
        %3399 = vperm.xlu0 %3398, %v3212
        %v3400 = vpop.permute.xlu0 %3399
        %3401 = vset.pattern.permute.xlu0 0
        %3402 = vperm.xlu0 %3401, %v3261
        %v3403 = vpop.permute.xlu0 %3402
        %3404 = vset.pattern.permute.xlu0 0
        %3405 = vperm.xlu0 %3404, %v3310
        %v3406 = vpop.permute.xlu0 %3405
        %v3407 = vlaneseq
        %v3408 = vand.u32 %v3407, 127
        %v3409 = vlaneseq
        %v3410 = vshrl.u32 %v3409, 7
        %v3411 = vsub.s32 %v3408, %v3410
        %v3412 = vrot.slane %v3313, %v3411
        %v3413 = vadd.s32 %v3408, 4294967288
        %v3414 = vlaneseq
        %v3415 = vshrl.u32 %v3414, 7
        %v3416 = vsub.s32 %v3413, %v3415
        %v3417 = vrot.slane %v3316, %v3416
        %vm3418 = vcmask 130112
        %v3419 = vsel %vm3418, %v3417, %v3412
        %v3420 = vadd.s32 %v3408, 4294967280
        %v3421 = vlaneseq
        %v3422 = vshrl.u32 %v3421, 7
        %v3423 = vsub.s32 %v3420, %v3422
        %v3424 = vrot.slane %v3319, %v3423
        %vm3425 = vcmask 195712
        %v3426 = vsel %vm3425, %v3424, %v3419
        %v3427 = vadd.s32 %v3408, 4294967272
        %v3428 = vlaneseq
        %v3429 = vshrl.u32 %v3428, 7
        %v3430 = vsub.s32 %v3427, %v3429
        %v3431 = vrot.slane %v3322, %v3430
        %vm3432 = vcmask 261312
        %v3433 = vsel %vm3432, %v3431, %v3426
        %v3434 = vadd.s32 %v3408, 4294967264
        %v3435 = vlaneseq
        %v3436 = vshrl.u32 %v3435, 7
        %v3437 = vsub.s32 %v3434, %v3436
        %v3438 = vrot.slane %v3325, %v3437
        %vm3439 = vcmask 326912
        %v3440 = vsel %vm3439, %v3438, %v3433
        %v3441 = vadd.s32 %v3408, 4294967256
        %v3442 = vlaneseq
        %v3443 = vshrl.u32 %v3442, 7
        %v3444 = vsub.s32 %v3441, %v3443
        %v3445 = vrot.slane %v3328, %v3444
        %vm3446 = vcmask 392512
        %v3447 = vsel %vm3446, %v3445, %v3440
        %v3448 = vadd.s32 %v3408, 4294967248
        %v3449 = vlaneseq
        %v3450 = vshrl.u32 %v3449, 7
        %v3451 = vsub.s32 %v3448, %v3450
        %v3452 = vrot.slane %v3331, %v3451
        %vm3453 = vcmask 458112
        %v3454 = vsel %vm3453, %v3452, %v3447
        %v3455 = vadd.s32 %v3408, 4294967240
        %v3456 = vlaneseq
        %v3457 = vshrl.u32 %v3456, 7
        %v3458 = vsub.s32 %v3455, %v3457
        %v3459 = vrot.slane %v3334, %v3458
        %vm3460 = vcmask 523712
        %v3461 = vsel %vm3460, %v3459, %v3454
        %v3462 = vadd.s32 %v3408, 4294967232
        %v3463 = vlaneseq
        %v3464 = vshrl.u32 %v3463, 7
        %v3465 = vsub.s32 %v3462, %v3464
        %v3466 = vrot.slane %v3337, %v3465
        %vm3467 = vcmask 589312
        %v3468 = vsel %vm3467, %v3466, %v3461
        %v3469 = vadd.s32 %v3408, 4294967224
        %v3470 = vlaneseq
        %v3471 = vshrl.u32 %v3470, 7
        %v3472 = vsub.s32 %v3469, %v3471
        %v3473 = vrot.slane %v3340, %v3472
        %vm3474 = vcmask 654912
        %v3475 = vsel %vm3474, %v3473, %v3468
        %v3476 = vadd.s32 %v3408, 4294967216
        %v3477 = vlaneseq
        %v3478 = vshrl.u32 %v3477, 7
        %v3479 = vsub.s32 %v3476, %v3478
        %v3480 = vrot.slane %v3343, %v3479
        %vm3481 = vcmask 720512
        %v3482 = vsel %vm3481, %v3480, %v3475
        %v3483 = vadd.s32 %v3408, 4294967208
        %v3484 = vlaneseq
        %v3485 = vshrl.u32 %v3484, 7
        %v3486 = vsub.s32 %v3483, %v3485
        %v3487 = vrot.slane %v3346, %v3486
        %vm3488 = vcmask 786112
        %v3489 = vsel %vm3488, %v3487, %v3482
        %v3490 = vadd.s32 %v3408, 4294967200
        %v3491 = vlaneseq
        %v3492 = vshrl.u32 %v3491, 7
        %v3493 = vsub.s32 %v3490, %v3492
        %v3494 = vrot.slane %v3349, %v3493
        %vm3495 = vcmask 851712
        %v3496 = vsel %vm3495, %v3494, %v3489
        %v3497 = vadd.s32 %v3408, 4294967192
        %v3498 = vlaneseq
        %v3499 = vshrl.u32 %v3498, 7
        %v3500 = vsub.s32 %v3497, %v3499
        %v3501 = vrot.slane %v3352, %v3500
        %vm3502 = vcmask 917312
        %v3503 = vsel %vm3502, %v3501, %v3496
        %v3504 = vadd.s32 %v3408, 4294967184
        %v3505 = vlaneseq
        %v3506 = vshrl.u32 %v3505, 7
        %v3507 = vsub.s32 %v3504, %v3506
        %v3508 = vrot.slane %v3355, %v3507
        %vm3509 = vcmask 982912
        %v3510 = vsel %vm3509, %v3508, %v3503
        %v3511 = vadd.s32 %v3408, 4294967176
        %v3512 = vlaneseq
        %v3513 = vshrl.u32 %v3512, 7
        %v3514 = vsub.s32 %v3511, %v3513
        %v3515 = vrot.slane %v3358, %v3514
        %vm3516 = vcmask 1048512
        %v3517 = vsel %vm3516, %v3515, %v3510
        %v3518 = vlaneseq
        %v3519 = vshrl.u32 %v3518, 7
        %v3520 = vsub.s32 %v3408, %v3519
        %v3521 = vrot.slane %v3361, %v3520
        %v3522 = vlaneseq
        %v3523 = vshrl.u32 %v3522, 7
        %v3524 = vsub.s32 %v3413, %v3523
        %v3525 = vrot.slane %v3364, %v3524
        %v3526 = vsel %vm3418, %v3525, %v3521
        %v3527 = vlaneseq
        %v3528 = vshrl.u32 %v3527, 7
        %v3529 = vsub.s32 %v3420, %v3528
        %v3530 = vrot.slane %v3367, %v3529
        %v3531 = vsel %vm3425, %v3530, %v3526
        %v3532 = vlaneseq
        %v3533 = vshrl.u32 %v3532, 7
        %v3534 = vsub.s32 %v3427, %v3533
        %v3535 = vrot.slane %v3370, %v3534
        %v3536 = vsel %vm3432, %v3535, %v3531
        %v3537 = vlaneseq
        %v3538 = vshrl.u32 %v3537, 7
        %v3539 = vsub.s32 %v3434, %v3538
        %v3540 = vrot.slane %v3373, %v3539
        %v3541 = vsel %vm3439, %v3540, %v3536
        %v3542 = vlaneseq
        %v3543 = vshrl.u32 %v3542, 7
        %v3544 = vsub.s32 %v3441, %v3543
        %v3545 = vrot.slane %v3376, %v3544
        %v3546 = vsel %vm3446, %v3545, %v3541
        %v3547 = vlaneseq
        %v3548 = vshrl.u32 %v3547, 7
        %v3549 = vsub.s32 %v3448, %v3548
        %v3550 = vrot.slane %v3379, %v3549
        %v3551 = vsel %vm3453, %v3550, %v3546
        %v3552 = vlaneseq
        %v3553 = vshrl.u32 %v3552, 7
        %v3554 = vsub.s32 %v3455, %v3553
        %v3555 = vrot.slane %v3382, %v3554
        %v3556 = vsel %vm3460, %v3555, %v3551
        %v3557 = vlaneseq
        %v3558 = vshrl.u32 %v3557, 7
        %v3559 = vsub.s32 %v3462, %v3558
        %v3560 = vrot.slane %v3385, %v3559
        %v3561 = vsel %vm3467, %v3560, %v3556
        %v3562 = vlaneseq
        %v3563 = vshrl.u32 %v3562, 7
        %v3564 = vsub.s32 %v3469, %v3563
        %v3565 = vrot.slane %v3388, %v3564
        %v3566 = vsel %vm3474, %v3565, %v3561
        %v3567 = vlaneseq
        %v3568 = vshrl.u32 %v3567, 7
        %v3569 = vsub.s32 %v3476, %v3568
        %v3570 = vrot.slane %v3391, %v3569
        %v3571 = vsel %vm3481, %v3570, %v3566
        %v3572 = vlaneseq
        %v3573 = vshrl.u32 %v3572, 7
        %v3574 = vsub.s32 %v3483, %v3573
        %v3575 = vrot.slane %v3394, %v3574
        %v3576 = vsel %vm3488, %v3575, %v3571
        %v3577 = vlaneseq
        %v3578 = vshrl.u32 %v3577, 7
        %v3579 = vsub.s32 %v3490, %v3578
        %v3580 = vrot.slane %v3397, %v3579
        %v3581 = vsel %vm3495, %v3580, %v3576
        %v3582 = vlaneseq
        %v3583 = vshrl.u32 %v3582, 7
        %v3584 = vsub.s32 %v3497, %v3583
        %v3585 = vrot.slane %v3400, %v3584
        %v3586 = vsel %vm3502, %v3585, %v3581
        %v3587 = vlaneseq
        %v3588 = vshrl.u32 %v3587, 7
        %v3589 = vsub.s32 %v3504, %v3588
        %v3590 = vrot.slane %v3403, %v3589
        %v3591 = vsel %vm3509, %v3590, %v3586
        %v3592 = vlaneseq
        %v3593 = vshrl.u32 %v3592, 7
        %v3594 = vsub.s32 %v3511, %v3593
        %v3595 = vrot.slane %v3406, %v3594
        %v3596 = vsel %vm3516, %v3595, %v3591
        %v3597 = vcombine.low %v3517, %v3596
        %v3599 = vunpack.c.l.s4 1966171168
        %v3600 = vunpack.c.0.s8 %v3599
        %v3601 = vlaneseq
        %v3602 = vshrl.u32 %v3601, 7
        %v3603 = vsub.s32 %v3600, %v3602
        %v3604 = vrot.slane %v3597, %v3603
        %v3606 = vunpack.c.l.s4 1966171168
        %v3607 = vunpack.c.0.s8 %v3606
        %v3608 = vlaneseq
        %v3609 = vshrl.u32 %v3608, 7
        %v3610 = vsub.s32 %v3607, %v3609
        %v3611 = vrot.slane %v3604, %v3610
        %v3613 = vsub.f32 %v686, %v3611
        %v3614 = vlaneseq
        %vm3615 = vcmp.ge.s32.totalorder %v3614, 0
        %vm3616 = vcmp.lt.s32.totalorder %v3614, 256
        %vm3617 = vmand %vm3615, %vm3616
        %3618 = vst.msk [vmem:[%s238] sm:$0x3] %vm3617, %v3613
        %s3619 = sand.u32 %s123, 1
        %s3620 = scalar_lea.sflag [#allocation3], %s3619
        %s3621 = sand.u32 %s123, 1
        %s3622 = smul.addr %s3621, 2
        %s3623 = scalar_lea.vmem [#allocation2], %s3622
        // Predicated region
        $region33: #{tpu_custom_call.1} parent=31 // pred_check
          %p3624 = pneg %p133
        $region34: #{tpu_custom_call.1} parent=31 // pred_check_branch
          %3626 = sbr.rel (%p3624) target = $region36
        $region35: #{tpu_custom_call.1} parent=31 // pred_region
          %s3627 = smul.u32 2, %s22
          %s3629 = ssub.s32 32, 32
          %3630 = vsyncadd %s3620, %s3629
          %s3631 = smul.addr %s21, 2
          %s3632 = sadd.s32 %s3627, %s3631
          %s3633 = smul.addr %s3632, 16
          %s3634 = scalar_lea.hbm %s3, %s3633
          %s3636 = sshll.u32 %s3623, 4
          %s3637 = int_to_ptr.vmem [resolvable:$true] %s3636
          %3639 = dma.vmem_to_hbm [thread:$0]  %s3637, 32, %s3634, %s3620
        $region36: #{tpu_custom_call.1} parent=31 // pred_fallthru
          _
      $region32: #{tpu_custom_call.1} parent=5 // pred_fallthru
        _
      %p3640 = scmp.le.s32.totalorder 2, %s12
      // Predicated region
      $region37: #{tpu_custom_call.1} parent=5 // pred_check
        %p3641 = pneg %p3640
      $region38: #{tpu_custom_call.1} parent=5 // pred_check_branch
        %3643 = sbr.rel (%p3641) target = $region40
      $region39: #{tpu_custom_call.1} parent=5 // pred_region
        %s3644 = ssub.s32 %s12, 2
        // Predicated region
        $region41: #{tpu_custom_call.1} parent=39 // pred_check
          %p3645 = pneg %p139
        $region42: #{tpu_custom_call.1} parent=39 // pred_check_branch
          %3647 = sbr.rel (%p3645) target = $region44
        $region43: #{tpu_custom_call.1} parent=39 // pred_region
          %s3648 = sand.u32 %s124, 1
          %s3649 = scalar_lea.sflag [#allocation3], %s3648
          %s3650 = sand.u32 %s124, 1
          %s3651 = smul.addr %s3650, 2
          %s3652 = scalar_lea.vmem [#allocation2], %s3651
          %3653 = dma.done %s3649, 32
        $region44: #{tpu_custom_call.1} parent=39 // pred_fallthru
          _
      $region40: #{tpu_custom_call.1} parent=5 // pred_fallthru
        _
    $region6: #{tpu_custom_call.1} parent=1 // loop_footer
      %s16 = sadd.s32 1, %s12
    $region7: #{tpu_custom_call.1} parent=1 // loop_footer_branch
      %11 = sbr.rel target = $region3
    $region8: #{tpu_custom_call.1} parent=1 // loop_exit
      _
    %3654 = vsyncpa [#allocation3], 1
    %s3655 = scalar_lea.sflag [#allocation3], 1
    %3656 = vsyncpa %s3655, 1

</llo_original>
